<compile_context>
chip_gen: v7x
topology: tpu7x:2x2x1
jax: 0.10.0
libtpu: 0.0.40
codegen_flags: <defaults>
</compile_context>

<pallas_src>
import functools
import math

import jax
import jax.numpy as jnp
from jax import lax
from jax.experimental import pallas as pl
from jax.experimental.pallas import tpu as pltpu

_VMEM_LIMIT_BYTES = 64 * 1024 * 1024
_TIME_TILE_CACHE = None


def _cdiv(a, b):
    return -(-a // b)


def _round_up(a, b):
    return _cdiv(a, b) * b


def _pick_time_tile():
    """Generation-aware time-tile target (multiple of 128)."""
    global _TIME_TILE_CACHE
    if _TIME_TILE_CACHE is None:
        tile = 512                                  # safe on v7x (64 MiB VMEM / TC)
        try:
            info = pltpu.get_tpu_info()
            vmem = getattr(info, "vmem_capacity_bytes", 0) or 0
            if vmem >= 100 * 1024 * 1024:
                tile = 1024                         # v5e/v6e: amortize grid-step cost
        except Exception:
            pass
        _TIME_TILE_CACHE = tile
    return _TIME_TILE_CACHE


def _pack_weights(w, stride, n_q, dtype):
    """(C_out, C_in, K) -> (n_q, C_out, stride*C_in), row order (r, c_in)."""
    c_out, c_in, k = w.shape
    k_pad = n_q * stride
    w_p = jnp.pad(w, ((0, 0), (0, 0), (0, k_pad - k)))
    w_p = w_p.reshape(c_out, c_in, n_q, stride)
    w_p = jnp.transpose(w_p, (2, 0, 3, 1))          # (n_q, C_out, stride, C_in)
    return w_p.reshape(n_q, c_out, stride * c_in).astype(dtype)


def _conv_block_kernel(x_ref, w_ref, p_ref, *rest, stride, n_taps, n_q,
                       c_in, c_out, t_tile, t_valid, use_mxu, has_bias,
                       norm, needs_mask, eps):
    """One (batch, time-tile) grid step.

    x_ref : (1, 1, stride, C_in, t_tile + n_q - 1)  phase-split input window
    w_ref : (n_q, C_out, stride*C_in)               per-phase weight slabs
    p_ref : (C_out, 3)                              packed [bias, gamma, beta]
    rest  : 'group_stats' -> (stats_out,)           stats_out: (1, C_out, 2)
            'group_apply' -> (stats_in, out)
            'layer'/'none'-> (out,)                 out: (1, C_out, t_tile)
    """
    xw = x_ref[0, 0]                                 # (stride, C_in, W)

    # ---------------- convolution ----------------
    if use_mxu:
        # ceil(k/stride) MXU matmuls (bf16 operands, f32 accumulation).
        acc = None
        for q in range(n_q):
            xq = xw[:, :, q:q + t_tile].reshape(stride * c_in, t_tile)
            yq = jnp.dot(w_ref[q], xq, preferred_element_type=jnp.float32)
            acc = yq if acc is None else acc + yq
        y = acc
    else:
        # Small-C_in (layer 0) path: k VPU multiply-accumulates, f32 all the way.
        y = jnp.zeros((c_out, t_tile), jnp.float32)
        for q in range(n_q):
            wq = w_ref[q].astype(jnp.float32)        # (C_out, stride*C_in)
            for r in range(stride):
                if q * stride + r >= n_taps:
                    continue
                for c in range(c_in):
                    col = wq[:, r * c_in + c:r * c_in + c + 1]          # (C_out, 1)
                    row = xw[r, c:c + 1, q:q + t_tile].astype(jnp.float32)  # (1, tT)
                    y = y + col * row

    if has_bias:
        y = y + p_ref[:, 0:1]

    # ---------------- group-norm stats pass ----------------
    if norm == "group_stats":
        (stats_ref,) = rest
        if needs_mask:
            jpos = (t_tile * pl.program_id(1)
                    + lax.broadcasted_iota(jnp.int32, (1, t_tile), 1))
            y_m = jnp.where(jpos < t_valid, y, 0.0)
        else:
            y_m = y
        s1 = jnp.sum(y_m, axis=1, keepdims=True)            # (C_out, 1)
        s2 = jnp.sum(y_m * y_m, axis=1, keepdims=True)

        @pl.when(pl.program_id(1) == 0)
        def _init():
            stats_ref[...] = jnp.zeros_like(stats_ref)

        stats_ref[0, :, 0:1] += s1
        stats_ref[0, :, 1:2] += s2
        return

    # ---------------- normalization + GELU + store ----------------
    if norm == "group_apply":
        stats_ref, o_ref = rest
        inv_n = 1.0 / float(t_valid)
        mean = stats_ref[0, :, 0:1] * inv_n
        ex2 = stats_ref[0, :, 1:2] * inv_n
        var = jnp.maximum(ex2 - mean * mean, 0.0)
        y = (y - mean) * lax.rsqrt(var + eps)
        y = y * p_ref[:, 1:2] + p_ref[:, 2:3]
    elif norm == "layer":
        (o_ref,) = rest
        mean = jnp.mean(y, axis=0, keepdims=True)            # over channels
        var = jnp.mean(jnp.square(y - mean), axis=0, keepdims=True)
        y = (y - mean) * lax.rsqrt(var + eps)
        y = y * p_ref[:, 1:2] + p_ref[:, 2:3]
    else:
        (o_ref,) = rest

    # Dropout(p=0) / eval -> identity.
    # TODO(synk): PyTorch nn.GELU() defaults to the exact erf form; the tanh
    # approximation (EUP) is used here to guarantee clean Mosaic lowering.
    y = jax.nn.gelu(y, approximate=True)
    o_ref[0] = y.astype(o_ref.dtype)


def conv_block(x, w, b, gamma, beta, *, stride, t_valid_in, norm, has_bias,
               act_dtype, eps=1e-5):
    """One fused conv + (norm) + GELU block.

    x: (B, C_in, T_phys); columns >= t_valid_in are carried-over padding and
    are ignored.  Returns (y, t_valid_out) with y: (B, C_out, T_out_pad).
    """
    B, C_in, T_phys = x.shape
    C_out, C_in_w, k = w.shape
    assert C_in_w == C_in, (C_in_w, C_in)
    T_out = (t_valid_in - k) // stride + 1
    assert T_out > 0, "time dimension too short for this conv layer"

    n_q = _cdiv(k, stride)
    qmax = n_q - 1
    use_mxu = (C_in % 8 == 0)

    # Time tiling: 128-multiple tiles -> lane-dense, unmasked output stores.
    tile_target = _pick_time_tile()
    if T_out > tile_target:
        nT = _cdiv(T_out, tile_target)
        tT = _round_up(_cdiv(T_out, nT), 128)
    else:
        nT = 1
        tT = _round_up(T_out, 128)
    T_out_pad = nT * tT

    # Phase-split layout (no k/stride-fold im2col duplication in HBM):
    #   x_ph[b, r, c, j] = x[b, c, j*stride + r]
    Tq = T_out_pad + qmax
    T_need = Tq * stride
    if T_need > T_phys:
        x_p = jnp.pad(x, ((0, 0), (0, 0), (0, T_need - T_phys)))
    else:
        x_p = x[:, :, :T_need]
    x_ph = jnp.transpose(x_p.reshape(B, C_in, Tq, stride), (0, 3, 1, 2))
    if nT == 1:
        x_win = x_ph[:, None]
    else:
        x_win = jnp.stack(
            [lax.slice_in_dim(x_ph, t * tT, t * tT + tT + qmax, axis=3)
             for t in range(nT)], axis=1)            # (B, nT, stride, C_in, tT+qmax)
    op_dtype = jnp.bfloat16 if use_mxu else x.dtype  # bf16 MXU operands
    x_win = x_win.astype(op_dtype)

    w_stack = _pack_weights(w, stride, n_q,
                            jnp.bfloat16 if use_mxu else jnp.float32)
    p = jnp.stack([b, gamma, beta], axis=1).astype(jnp.float32)   # (C_out, 3)

    W = tT + qmax
    x_spec = pl.BlockSpec((1, 1, stride, C_in, W), lambda bi, ti: (bi, ti, 0, 0, 0))
    w_spec = pl.BlockSpec((n_q, C_out, stride * C_in), lambda bi, ti: (0, 0, 0))
    p_spec = pl.BlockSpec((C_out, 3), lambda bi, ti: (0, 0))
    o_spec = pl.BlockSpec((1, C_out, tT), lambda bi, ti: (bi, 0, ti))
    s_spec = pl.BlockSpec((1, C_out, 2), lambda bi, ti: (bi, 0, 0))

    common = dict(stride=stride, n_taps=k, n_q=n_q, c_in=C_in, c_out=C_out,
                  t_tile=tT, t_valid=T_out, use_mxu=use_mxu, has_bias=has_bias,
                  needs_mask=(T_out_pad != T_out), eps=eps)

    conv_flops = 2 * B * nT * C_out * (n_q * stride * C_in) * tT
    in_bytes = (x_win.size * x_win.dtype.itemsize
                + w_stack.size * w_stack.dtype.itemsize + p.size * 4)

    def _call(kernel_norm, arrays, in_specs, out_shape, out_spec, semantics,
              transcendentals, extra_bytes):
        return pl.pallas_call(
            functools.partial(_conv_block_kernel, norm=kernel_norm, **common),
            out_shape=out_shape,
            grid_spec=pltpu.PrefetchScalarGridSpec(
                num_scalar_prefetch=0, grid=(B, nT),
                in_specs=in_specs, out_specs=out_spec),
            compiler_params=pltpu.CompilerParams(
                dimension_semantics=semantics,
                vmem_limit_bytes=_VMEM_LIMIT_BYTES),
            cost_estimate=pl.CostEstimate(
                flops=conv_flops, transcendentals=transcendentals,
                bytes_accessed=in_bytes + extra_bytes),
        )(*arrays)

    act_bytes = B * C_out * T_out_pad * jnp.dtype(act_dtype).itemsize
    if norm == "group":
        # Pass 1: per-channel masked sum / sum-of-squares across all time tiles.
        stats = _call("group_stats", (x_win, w_stack, p),
                      [x_spec, w_spec, p_spec],
                      jax.ShapeDtypeStruct((B, C_out, 2), jnp.float32), s_spec,
                      ("parallel", "arbitrary"), 0, B * C_out * 2 * 4)
        # Pass 2: recompute conv (cheap, C_in == 1), normalize + GELU + store.
        y = _call("group_apply", (x_win, w_stack, p, stats),
                  [x_spec, w_spec, p_spec, s_spec],
                  jax.ShapeDtypeStruct((B, C_out, T_out_pad), act_dtype), o_spec,
                  ("parallel", "parallel"), B * C_out * T_out_pad,
                  act_bytes + B * C_out * 2 * 4)
    else:
        y = _call("layer" if norm == "layer" else "none",
                  (x_win, w_stack, p), [x_spec, w_spec, p_spec],
                  jax.ShapeDtypeStruct((B, C_out, T_out_pad), act_dtype), o_spec,
                  ("parallel", "parallel"), B * C_out * T_out_pad, act_bytes)
    return y, T_out


class ConvFeatureExtractionModel:
    """JAX/Pallas port of the PyTorch ConvFeatureExtractionModel (conv_type='default')."""

    def __init__(self, conv_layers, mode="default", conv_bias=False,
                 act_dtype=jnp.float32, key=None):
        assert mode in {"default", "layer_norm"}
        # TODO(synk): conv_type 'conv2d' / 'custom' branches (2-D convs) not ported.
        self.mode = mode
        self.conv_bias = conv_bias
        self.act_dtype = act_dtype
        self.layers = []
        if key is None:
            key = jax.random.PRNGKey(0)
        in_d = 1
        for i, cl in enumerate(conv_layers):
            assert len(cl) == 3, "invalid conv definition: " + str(cl)
            dim, k, stride = cl
            key, wk, bk = jax.random.split(key, 3)
            std = math.sqrt(2.0 / (in_d * k))        # kaiming_normal_, fan_in
            w = std * jax.random.normal(wk, (dim, in_d, k), dtype=jnp.float32)
            if conv_bias:
                bound = 1.0 / math.sqrt(in_d * k)
                b = jax.random.uniform(bk, (dim,), dtype=jnp.float32,
                                       minval=-bound, maxval=bound)
            else:
                b = jnp.zeros((dim,), jnp.float32)
            self.layers.append(dict(
                w=w, b=b,
                gamma=jnp.ones((dim,), jnp.float32),
                beta=jnp.zeros((dim,), jnp.float32),
                stride=stride, has_bias=conv_bias,
                is_group_norm=(mode == "default" and i == 0),
                is_layer_norm=(mode == "layer_norm"),
            ))
            in_d = dim

    def forward(self, x, mask=None):
        del mask                                   # unused (matches PyTorch API)
        x = x[:, None, :]                          # (B, T) -> (B, 1, T)
        t_valid = x.shape[-1]
        for layer in self.layers:
            norm = ("group" if layer["is_group_norm"]
                    else "layer" if layer["is_layer_norm"] else "none")
            x, t_valid = conv_block(
                x, layer["w"], layer["b"], layer["gamma"], layer["beta"],
                stride=layer["stride"], t_valid_in=t_valid, norm=norm,
                has_bias=layer["has_bias"], act_dtype=self.act_dtype)
        # Drop the lane-padding only once, at the very end of the stack.
        return x[:, :, :t_valid]

    __call__ = forward


def _reference_forward(model, x):
    """Pure-JAX reference mirroring the kernel math (bf16 MXU operands on the
    C_in%8==0 layers, f32 accumulation / norm, tanh-GELU, act_dtype storage)."""
    x = x[:, None, :].astype(jnp.float32)
    for layer in model.layers:
        w, b = layer["w"], layer["b"]
        if w.shape[1] % 8 == 0:
            lhs, rhs = x.astype(jnp.bfloat16), w.astype(jnp.bfloat16)
        else:
            lhs, rhs = x, w
        y = lax.conv_general_dilated(
            lhs, rhs, (layer["stride"],), "VALID",
            dimension_numbers=("NCH", "OIH", "NCH"),
            preferred_element_type=jnp.float32)
        if layer["has_bias"]:
            y = y + b[None, :, None]
        if layer["is_group_norm"]:
            mean = jnp.mean(y, axis=-1, keepdims=True)
            var = jnp.mean(jnp.square(y - mean), axis=-1, keepdims=True)
            y = (y - mean) / jnp.sqrt(var + 1e-5)
            y = y * layer["gamma"][None, :, None] + layer["beta"][None, :, None]
        elif layer["is_layer_norm"]:
            mean = jnp.mean(y, axis=1, keepdims=True)
            var = jnp.mean(jnp.square(y - mean), axis=1, keepdims=True)
            y = (y - mean) / jnp.sqrt(var + 1e-5)
            y = y * layer["gamma"][None, :, None] + layer["beta"][None, :, None]
        y = jax.nn.gelu(y, approximate=True)
        x = y.astype(model.act_dtype).astype(jnp.float32)
    return x.astype(model.act_dtype)


if __name__ == "__main__":
    # Small WavLM-style stack: (dim, kernel, stride).  Layer-0 GroupNorm gets
    # a multi-tile (nT=2) time axis so the two-pass stats path is exercised.
    conv_layers = [(32, 10, 5), (32, 3, 2), (16, 2, 2)]
    B, T = 2, 4000

    key = jax.random.PRNGKey(0)
    kx, k1, k2 = jax.random.split(key, 3)
    x = jax.random.normal(kx, (B, T), dtype=jnp.float32)

    t_ref = T
    for _, k_, s_ in conv_layers:
        t_ref = (t_ref - k_) // s_ + 1                      # 799 -> 399 -> 199

    # 1) 'default' mode: GroupNorm on layer 0 (two-pass across time tiles).
    model = ConvFeatureExtractionModel(conv_layers, mode="default",
                                       conv_bias=False, key=k1)
    y = model(x)
    jax.block_until_ready(y)
    assert y.shape == (B, conv_layers[-1][0], t_ref), y.shape
    y_ref = _reference_forward(model, x)
    err = float(jnp.max(jnp.abs(y - y_ref)))
    assert jnp.allclose(y, y_ref, rtol=2e-3, atol=2e-3), err

    # 2) 'layer_norm' mode with conv bias (per-time-step LayerNorm path).
    model_ln = ConvFeatureExtractionModel(conv_layers, mode="layer_norm",
                                          conv_bias=True, key=k2)
    y_ln = model_ln(x)
    jax.block_until_ready(y_ln)
    assert y_ln.shape == (B, conv_layers[-1][0], t_ref), y_ln.shape
    y_ln_ref = _reference_forward(model_ln, x)
    err_ln = float(jnp.max(jnp.abs(y_ln - y_ln_ref)))
    assert jnp.allclose(y_ln, y_ln_ref, rtol=2e-3, atol=2e-3), err_ln

    # 3) bf16 inter-layer activations (production configuration).
    model_bf = ConvFeatureExtractionModel(conv_layers, mode="default",
                                          conv_bias=False,
                                          act_dtype=jnp.bfloat16, key=k1)
    y_bf = model_bf(x)
    jax.block_until_ready(y_bf)
    assert y_bf.shape == (B, conv_layers[-1][0], t_ref), y_bf.shape
    y_bf32 = y_bf.astype(jnp.float32)
    assert bool(jnp.all(jnp.isfinite(y_bf32)))
    y_bf_ref = _reference_forward(model_bf, x).astype(jnp.float32)
    err_bf = float(jnp.max(jnp.abs(y_bf32 - y_bf_ref)))
    assert jnp.allclose(y_bf32, y_bf_ref, rtol=6e-2, atol=6e-2), err_bf

    print("KERNEL_OK")
</pallas_src>

<mosaic_0001>
module attributes {stable_mosaic.version = 11 : i64} {
  func.func @_conv_block_kernel(%arg0: i32, %arg1: i32, %arg2: memref<1x1x5x1x513xf32, #tpu.memory_space<vmem>>, %arg3: memref<2x32x5xf32, #tpu.memory_space<vmem>>, %arg4: memref<32x3xf32, #tpu.memory_space<vmem>>, %arg5: memref<1x32x2xf32, #tpu.memory_space<vmem>>) attributes {dimension_semantics = [#tpu.dimension_semantics<parallel>, #tpu.dimension_semantics<arbitrary>], iteration_bounds = array<i64: 2, 2>, scalar_prefetch = 0 : i64, scratch_operands = 0 : i64, tpu.core_type = #tpu.core_type<tc>, window_params = [{transform_indices = @transform_0, window_bounds = array<i64: 1, 1, 5, 1, 513>}, {pipeline_mode = #tpu.pipeline_mode<synchronous>, transform_indices = @transform_1, window_bounds = array<i64: 2, 32, 5>}, {pipeline_mode = #tpu.pipeline_mode<synchronous>, transform_indices = @transform_2, window_bounds = array<i64: 32, 3>}, {transform_indices = @transform_3, window_bounds = array<i64: 1, 32, 2>}]} {
    %c0 = arith.constant 0 : index
    %c0_0 = arith.constant 0 : index
    %c0_1 = arith.constant 0 : index
    %c0_2 = arith.constant 0 : index
    %c0_3 = arith.constant 0 : index
    %0 = vector.load %arg2[%c0, %c0_0, %c0_1, %c0_2, %c0_3] : memref<1x1x5x1x513xf32, #tpu.memory_space<vmem>>, vector<1x1x5x1x513xf32>
    %1 = vector.shape_cast %0 : vector<1x1x5x1x513xf32> to vector<5x1x513xf32>
    %cst = arith.constant 0.000000e+00 : f32
    %2 = vector.broadcast %cst : f32 to vector<32x512xf32>
    %c0_4 = arith.constant 0 : index
    %c0_5 = arith.constant 0 : index
    %c0_6 = arith.constant 0 : index
    %3 = vector.load %arg3[%c0_4, %c0_5, %c0_6] : memref<2x32x5xf32, #tpu.memory_space<vmem>>, vector<1x32x5xf32>
    %4 = vector.shape_cast %3 : vector<1x32x5xf32> to vector<32x5xf32>
    %5 = vector.extract_strided_slice %4 {offsets = [0, 0], sizes = [32, 1], strides = [1, 1]} : vector<32x5xf32> to vector<32x1xf32>
    %6 = vector.extract_strided_slice %1 {offsets = [0, 0, 0], sizes = [1, 1, 512], strides = [1, 1, 1]} : vector<5x1x513xf32> to vector<1x1x512xf32>
    %7 = vector.shape_cast %6 : vector<1x1x512xf32> to vector<1x512xf32>
    %8 = vector.broadcast %5 : vector<32x1xf32> to vector<32x512xf32>
    %9 = vector.broadcast %7 : vector<1x512xf32> to vector<32x512xf32>
    %10 = arith.mulf %8, %9 : vector<32x512xf32>
    %11 = arith.addf %2, %10 : vector<32x512xf32>
    %12 = vector.extract_strided_slice %4 {offsets = [0, 1], sizes = [32, 1], strides = [1, 1]} : vector<32x5xf32> to vector<32x1xf32>
    %13 = vector.extract_strided_slice %1 {offsets = [1, 0, 0], sizes = [1, 1, 512], strides = [1, 1, 1]} : vector<5x1x513xf32> to vector<1x1x512xf32>
    %14 = vector.shape_cast %13 : vector<1x1x512xf32> to vector<1x512xf32>
    %15 = vector.broadcast %12 : vector<32x1xf32> to vector<32x512xf32>
    %16 = vector.broadcast %14 : vector<1x512xf32> to vector<32x512xf32>
    %17 = arith.mulf %15, %16 : vector<32x512xf32>
    %18 = arith.addf %11, %17 : vector<32x512xf32>
    %19 = vector.extract_strided_slice %4 {offsets = [0, 2], sizes = [32, 1], strides = [1, 1]} : vector<32x5xf32> to vector<32x1xf32>
    %20 = vector.extract_strided_slice %1 {offsets = [2, 0, 0], sizes = [1, 1, 512], strides = [1, 1, 1]} : vector<5x1x513xf32> to vector<1x1x512xf32>
    %21 = vector.shape_cast %20 : vector<1x1x512xf32> to vector<1x512xf32>
    %22 = vector.broadcast %19 : vector<32x1xf32> to vector<32x512xf32>
    %23 = vector.broadcast %21 : vector<1x512xf32> to vector<32x512xf32>
    %24 = arith.mulf %22, %23 : vector<32x512xf32>
    %25 = arith.addf %18, %24 : vector<32x512xf32>
    %26 = vector.extract_strided_slice %4 {offsets = [0, 3], sizes = [32, 1], strides = [1, 1]} : vector<32x5xf32> to vector<32x1xf32>
    %27 = vector.extract_strided_slice %1 {offsets = [3, 0, 0], sizes = [1, 1, 512], strides = [1, 1, 1]} : vector<5x1x513xf32> to vector<1x1x512xf32>
    %28 = vector.shape_cast %27 : vector<1x1x512xf32> to vector<1x512xf32>
    %29 = vector.broadcast %26 : vector<32x1xf32> to vector<32x512xf32>
    %30 = vector.broadcast %28 : vector<1x512xf32> to vector<32x512xf32>
    %31 = arith.mulf %29, %30 : vector<32x512xf32>
    %32 = arith.addf %25, %31 : vector<32x512xf32>
    %33 = vector.extract_strided_slice %4 {offsets = [0, 4], sizes = [32, 1], strides = [1, 1]} : vector<32x5xf32> to vector<32x1xf32>
    %34 = vector.extract_strided_slice %1 {offsets = [4, 0, 0], sizes = [1, 1, 512], strides = [1, 1, 1]} : vector<5x1x513xf32> to vector<1x1x512xf32>
    %35 = vector.shape_cast %34 : vector<1x1x512xf32> to vector<1x512xf32>
    %36 = vector.broadcast %33 : vector<32x1xf32> to vector<32x512xf32>
    %37 = vector.broadcast %35 : vector<1x512xf32> to vector<32x512xf32>
    %38 = arith.mulf %36, %37 : vector<32x512xf32>
    %39 = arith.addf %32, %38 : vector<32x512xf32>
    %c1 = arith.constant 1 : index
    %c0_7 = arith.constant 0 : index
    %c0_8 = arith.constant 0 : index
    %40 = vector.load %arg3[%c1, %c0_7, %c0_8] : memref<2x32x5xf32, #tpu.memory_space<vmem>>, vector<1x32x5xf32>
    %41 = vector.shape_cast %40 : vector<1x32x5xf32> to vector<32x5xf32>
    %42 = vector.extract_strided_slice %41 {offsets = [0, 0], sizes = [32, 1], strides = [1, 1]} : vector<32x5xf32> to vector<32x1xf32>
    %43 = vector.extract_strided_slice %1 {offsets = [0, 0, 1], sizes = [1, 1, 512], strides = [1, 1, 1]} : vector<5x1x513xf32> to vector<1x1x512xf32>
    %44 = vector.shape_cast %43 : vector<1x1x512xf32> to vector<1x512xf32>
    %45 = vector.broadcast %42 : vector<32x1xf32> to vector<32x512xf32>
    %46 = vector.broadcast %44 : vector<1x512xf32> to vector<32x512xf32>
    %47 = arith.mulf %45, %46 : vector<32x512xf32>
    %48 = arith.addf %39, %47 : vector<32x512xf32>
    %49 = vector.extract_strided_slice %41 {offsets = [0, 1], sizes = [32, 1], strides = [1, 1]} : vector<32x5xf32> to vector<32x1xf32>
    %50 = vector.extract_strided_slice %1 {offsets = [1, 0, 1], sizes = [1, 1, 512], strides = [1, 1, 1]} : vector<5x1x513xf32> to vector<1x1x512xf32>
    %51 = vector.shape_cast %50 : vector<1x1x512xf32> to vector<1x512xf32>
    %52 = vector.broadcast %49 : vector<32x1xf32> to vector<32x512xf32>
    %53 = vector.broadcast %51 : vector<1x512xf32> to vector<32x512xf32>
    %54 = arith.mulf %52, %53 : vector<32x512xf32>
    %55 = arith.addf %48, %54 : vector<32x512xf32>
    %56 = vector.extract_strided_slice %41 {offsets = [0, 2], sizes = [32, 1], strides = [1, 1]} : vector<32x5xf32> to vector<32x1xf32>
    %57 = vector.extract_strided_slice %1 {offsets = [2, 0, 1], sizes = [1, 1, 512], strides = [1, 1, 1]} : vector<5x1x513xf32> to vector<1x1x512xf32>
    %58 = vector.shape_cast %57 : vector<1x1x512xf32> to vector<1x512xf32>
    %59 = vector.broadcast %56 : vector<32x1xf32> to vector<32x512xf32>
    %60 = vector.broadcast %58 : vector<1x512xf32> to vector<32x512xf32>
    %61 = arith.mulf %59, %60 : vector<32x512xf32>
    %62 = arith.addf %55, %61 : vector<32x512xf32>
    %63 = vector.extract_strided_slice %41 {offsets = [0, 3], sizes = [32, 1], strides = [1, 1]} : vector<32x5xf32> to vector<32x1xf32>
    %64 = vector.extract_strided_slice %1 {offsets = [3, 0, 1], sizes = [1, 1, 512], strides = [1, 1, 1]} : vector<5x1x513xf32> to vector<1x1x512xf32>
    %65 = vector.shape_cast %64 : vector<1x1x512xf32> to vector<1x512xf32>
    %66 = vector.broadcast %63 : vector<32x1xf32> to vector<32x512xf32>
    %67 = vector.broadcast %65 : vector<1x512xf32> to vector<32x512xf32>
    %68 = arith.mulf %66, %67 : vector<32x512xf32>
    %69 = arith.addf %62, %68 : vector<32x512xf32>
    %70 = vector.extract_strided_slice %41 {offsets = [0, 4], sizes = [32, 1], strides = [1, 1]} : vector<32x5xf32> to vector<32x1xf32>
    %71 = vector.extract_strided_slice %1 {offsets = [4, 0, 1], sizes = [1, 1, 512], strides = [1, 1, 1]} : vector<5x1x513xf32> to vector<1x1x512xf32>
    %72 = vector.shape_cast %71 : vector<1x1x512xf32> to vector<1x512xf32>
    %73 = vector.broadcast %70 : vector<32x1xf32> to vector<32x512xf32>
    %74 = vector.broadcast %72 : vector<1x512xf32> to vector<32x512xf32>
    %75 = arith.mulf %73, %74 : vector<32x512xf32>
    %76 = arith.addf %69, %75 : vector<32x512xf32>
    %c512_i32 = arith.constant 512 : i32
    %77 = arith.muli %c512_i32, %arg1 : i32
    %78 = tpu.iota {dimensions = array<i32: 1>} : vector<1x512xi32>
    %79 = vector.broadcast %77 : i32 to vector<1x512xi32>
    %80 = arith.addi %79, %78 : vector<1x512xi32>
    %c799_i32 = arith.constant 799 : i32
    %81 = vector.broadcast %c799_i32 : i32 to vector<1x512xi32>
    %82 = arith.cmpi slt, %80, %81 : vector<1x512xi32>
    %cst_9 = arith.constant 0.000000e+00 : f32
    %83 = vector.shape_cast %82 : vector<1x512xi1> to vector<1x512xi1>
    %84 = vector.broadcast %83 : vector<1x512xi1> to vector<32x512xi1>
    %85 = vector.broadcast %cst_9 : f32 to vector<32x512xf32>
    %86 = arith.select %84, %76, %85 : vector<32x512xi1>, vector<32x512xf32>
    %cst_10 = arith.constant dense<0.000000e+00> : vector<32xf32>
    %87 = vector.multi_reduction <add>, %86, %cst_10 [1] : vector<32x512xf32> to vector<32xf32>
    %88 = vector.shape_cast %87 : vector<32xf32> to vector<32x1xf32>
    %89 = arith.mulf %86, %86 : vector<32x512xf32>
    %cst_11 = arith.constant dense<0.000000e+00> : vector<32xf32>
    %90 = vector.multi_reduction <add>, %89, %cst_11 [1] : vector<32x512xf32> to vector<32xf32>
    %91 = vector.shape_cast %90 : vector<32xf32> to vector<32x1xf32>
    %c0_i32 = arith.constant 0 : i32
    %92 = arith.cmpi eq, %arg1, %c0_i32 : i32
    %93 = arith.extui %92 : i1 to i32
    %c0_i32_12 = arith.constant 0 : i32
    %94 = arith.cmpi ne, %93, %c0_i32_12 : i32
    scf.if %94 {
      %cst_25 = arith.constant 0.000000e+00 : f32
      %107 = vector.broadcast %cst_25 : f32 to vector<1x32x2xf32>
      %c0_26 = arith.constant 0 : index
      %c0_27 = arith.constant 0 : index
      %c0_28 = arith.constant 0 : index
      %108 = vector.load %arg5[%c0_26, %c0_27, %c0_28] : memref<1x32x2xf32, #tpu.memory_space<vmem>>, vector<1x32x2xf32>
      tpu.vector_store %arg5[%c0_26, %c0_27, %c0_28], %107 {strides = array<i32>} : memref<1x32x2xf32, #tpu.memory_space<vmem>>, vector<1x32x2xf32>,
    } else {
    }
    %c0_13 = arith.constant 0 : index
    %c0_14 = arith.constant 0 : index
    %c0_15 = arith.constant 0 : index
    %95 = vector.load %arg5[%c0_13, %c0_14, %c0_15] : memref<1x32x2xf32, #tpu.memory_space<vmem>>, vector<1x32x1xf32>
    %96 = vector.shape_cast %95 : vector<1x32x1xf32> to vector<32x1xf32>
    %97 = arith.addf %96, %88 : vector<32x1xf32>
    %c0_16 = arith.constant 0 : index
    %c0_17 = arith.constant 0 : index
    %c0_18 = arith.constant 0 : index
    %98 = vector.load %arg5[%c0_16, %c0_17, %c0_18] : memref<1x32x2xf32, #tpu.memory_space<vmem>>, vector<1x32x1xf32>
    %99 = vector.shape_cast %98 : vector<1x32x1xf32> to vector<32x1xf32>
    %100 = vector.shape_cast %97 : vector<32x1xf32> to vector<1x32x1xf32>
    tpu.vector_store %arg5[%c0_16, %c0_17, %c0_18], %100 {strides = array<i32>} : memref<1x32x2xf32, #tpu.memory_space<vmem>>, vector<1x32x1xf32>,
    %c0_19 = arith.constant 0 : index
    %c0_20 = arith.constant 0 : index
    %c1_21 = arith.constant 1 : index
    %101 = vector.load %arg5[%c0_19, %c0_20, %c1_21] : memref<1x32x2xf32, #tpu.memory_space<vmem>>, vector<1x32x1xf32>
    %102 = vector.shape_cast %101 : vector<1x32x1xf32> to vector<32x1xf32>
    %103 = arith.addf %102, %91 : vector<32x1xf32>
    %c0_22 = arith.constant 0 : index
    %c0_23 = arith.constant 0 : index
    %c1_24 = arith.constant 1 : index
    %104 = vector.load %arg5[%c0_22, %c0_23, %c1_24] : memref<1x32x2xf32, #tpu.memory_space<vmem>>, vector<1x32x1xf32>
    %105 = vector.shape_cast %104 : vector<1x32x1xf32> to vector<32x1xf32>
    %106 = vector.shape_cast %103 : vector<32x1xf32> to vector<1x32x1xf32>
    tpu.vector_store %arg5[%c0_22, %c0_23, %c1_24], %106 {strides = array<i32>} : memref<1x32x2xf32, #tpu.memory_space<vmem>>, vector<1x32x1xf32>,
    return
  }
  func.func @transform_0(%arg0: i32, %arg1: i32) -> (i32, i32, i32, i32, i32) {
    %c0_i32 = arith.constant 0 : i32
    %c0_i32_0 = arith.constant 0 : i32
    %c0_i32_1 = arith.constant 0 : i32
    %c0_i32_2 = arith.constant 0 : i32
    return %arg0, %arg1, %c0_i32, %c0_i32_0, %c0_i32_1 : i32, i32, i32, i32, i32
  }
  func.func @transform_1(%arg0: i32, %arg1: i32) -> (i32, i32, i32) {
    %c0_i32 = arith.constant 0 : i32
    %c0_i32_0 = arith.constant 0 : i32
    %c0_i32_1 = arith.constant 0 : i32
    %c0_i32_2 = arith.constant 0 : i32
    return %c0_i32, %c0_i32_0, %c0_i32_1 : i32, i32, i32
  }
  func.func @transform_2(%arg0: i32, %arg1: i32) -> (i32, i32) {
    %c0_i32 = arith.constant 0 : i32
    %c0_i32_0 = arith.constant 0 : i32
    %c0_i32_1 = arith.constant 0 : i32
    return %c0_i32, %c0_i32_0 : i32, i32
  }
  func.func @transform_3(%arg0: i32, %arg1: i32) -> (i32, i32, i32) {
    %c0_i32 = arith.constant 0 : i32
    %c0_i32_0 = arith.constant 0 : i32
    %c0_i32_1 = arith.constant 0 : i32
    return %arg0, %c0_i32, %c0_i32_0 : i32, i32, i32
  }
}

</mosaic_0001>

<llo_original>
// kernel: tpu_custom_call.1
$region0: #{tpu_custom_call.1}
  #allocation0 [shape = 'u32[]', space=smem, size = 0x4, offset = 0x4, fixed_abs, tag = 'smem constant byte address 0x4 - core index']
  #allocation1 [shape = 'u32[144,128]{1,0:T(1,128)}', space=vmem, size = 0x12000, scoped, tag = 'internal scratch']
  %s0 = inlined_call_operand.hbm [shape: f32[2,2,5,1,513], index: 0, kind: input, shape index: {}]
  %s1 = inlined_call_operand.hbm [shape: f32[2,32,5], index: 1, kind: input, shape index: {}]
  %s2 = inlined_call_operand.hbm [shape: f32[32,3], index: 2, kind: input, shape index: {}]
  %s3 = inlined_call_operand.hbm [shape: f32[2,32,2], index: 3, kind: output, shape index: {}]
  %s4 = sld [smem:[#allocation0]]
  $region61: #{tpu_custom_call.1} parent=0
    _
  %s6 = ssub.s32 1, %s4
  %s7 = scalar_select 0, %s6, %s4
  $region1: #{tpu_custom_call.1} parent=0
    #allocation2 [shape = 'u8[25600]{0}', space=vmem, size = 0x6400, scoped, tag = 'input window, operand 0']
    #allocation3 [shape = 's32[2]{0}', space=sflag, size = 0x8, scoped, tag = 'scoped memory for tpu_custom_call.1']
    #allocation4 [shape = 's32[2]{0}', space=sflag, size = 0x8, scoped, tag = 'scoped memory for tpu_custom_call.1']
    #allocation5 [shape = 'u8[32768]{0}', space=vmem, size = 0x8000, scoped, tag = 'input window, operand 1, single buffered']
    #allocation6 [shape = 's32[1]{0}', space=sflag, size = 0x4, scoped, tag = 'scoped memory for tpu_custom_call.1']
    #allocation7 [shape = 'u8[16384]{0}', space=vmem, size = 0x4000, scoped, tag = 'input window, operand 2, single buffered']
    #allocation8 [shape = 'u8[32768]{0}', space=vmem, size = 0x8000, scoped, tag = 'output window, operand 0']
    %8 = vsyncpa [#allocation3], 0
    %s9 = scalar_lea.sflag [#allocation3], 1
    %10 = vsyncpa %s9, 0
    %11 = vsyncpa [#allocation6], 0
    %12 = vsyncpa [#allocation4], 0
    %s13 = scalar_lea.sflag [#allocation4], 1
    %14 = vsyncpa %s13, 0
    loop: start=0, step=1, limit=6
    $region2: #{tpu_custom_call.1} parent=1 // loop_pre_header
      _
    $region3: #{tpu_custom_call.1} parent=1 // loop_header
      %s16 = sphi 0, %s20
      %p17 = scmp.ge.s32.totalorder %s16, 6
      %s23 = sphi 0, %s35
      %s24 = sphi 0, %s31
      %s25 = sphi 0, %s23
      %s26 = sphi 0, %s24
      %s27 = sphi 0, %s25
      %s28 = sphi 0, %s26
      %s40 = sphi 0, %s42
      %s43 = sphi 0, %s40
      %s44 = sphi 0, %s43
      %s60 = sphi 0, %s44
      %s64 = sphi 0, %s64
      %s66 = sphi 0, %s64
      %s67 = sphi 0, %s66
      %s81 = sphi 0, %s67
      %s85 = sphi 0, %s85
      %s87 = sphi 0, %s85
      %s88 = sphi 0, %s87
      %s102 = sphi 0, %s88
      %s108 = sphi 0, %s110
      %s111 = sphi 0, %s108
      %s112 = sphi 0, %s111
      %s128 = sphi 0, %s112
    $region4: #{tpu_custom_call.1} parent=1 // loop_header_branch
      %19 = sbr.rel (%p17) target = $region8
    $region5: #{tpu_custom_call.1} parent=1 // loop_body
      %s21 = ssub.s32 %s16, 1
      %s22 = ssub.s32 %s16, 2
      %s29 = sadd.s32 1, %s24
      %p30 = scmp.ge.s32.totalorder %s29, 2
      %s31 = scalar_select %p30, 0, %s29
      %s32 = sadd.s32 1, %s23
      %s33 = scalar_select %p30, %s32, %s23
      %p34 = scmp.ge.s32.totalorder %s33, 2
      %s35 = scalar_select %p34, 0, %s33
      %s36 = ssub.s32 %s23, %s35
      %s37 = ssub.s32 %s24, %s31
      %s38 = sor.u32 %s36, %s37
      %p39 = scmp.eq.s32.totalorder %s38, 0
      %s41 = sadd.s32 %s40, 1
      %s42 = scalar_select %p39, %s40, %s41
      %p45 = pneg %p39
      %p46 = scmp.eq.s32.totalorder %s16, 3
      %p47 = por %p45, %p46
      %p48 = scmp.ne.s32.totalorder %s40, %s43
      %p49 = scmp.eq.s32.totalorder %s16, 0
      %p50 = por %p48, %p49
      %p51 = scmp.ne.s32.totalorder %s40, %s43
      %p52 = scmp.eq.s32.totalorder %s21, 3
      %p53 = por %p51, %p52
      %p54 = scmp.ne.s32.totalorder %s43, %s44
      %p55 = scmp.eq.s32.totalorder %s21, 0
      %p56 = por %p54, %p55
      %p57 = scmp.ne.s32.totalorder %s43, %s44
      %p58 = scmp.eq.s32.totalorder %s22, 3
      %p59 = por %p57, %p58
      %p61 = scmp.ne.s32.totalorder %s44, %s60
      %p62 = scmp.eq.s32.totalorder %s22, 0
      %p63 = por %p61, %p62
      %s65 = sadd.s32 %s64, 1
      %p68 = scmp.eq.s32.totalorder %s16, 3
      %p69 = scmp.ne.s32.totalorder %s64, %s66
      %p70 = scmp.eq.s32.totalorder %s16, 0
      %p71 = por %p69, %p70
      %p72 = scmp.ne.s32.totalorder %s64, %s66
      %p73 = scmp.eq.s32.totalorder %s21, 3
      %p74 = por %p72, %p73
      %p75 = scmp.ne.s32.totalorder %s66, %s67
      %p76 = scmp.eq.s32.totalorder %s21, 0
      %p77 = por %p75, %p76
      %p78 = scmp.ne.s32.totalorder %s66, %s67
      %p79 = scmp.eq.s32.totalorder %s22, 3
      %p80 = por %p78, %p79
      %p82 = scmp.ne.s32.totalorder %s67, %s81
      %p83 = scmp.eq.s32.totalorder %s22, 0
      %p84 = por %p82, %p83
      %s86 = sadd.s32 %s85, 1
      %p89 = scmp.eq.s32.totalorder %s16, 3
      %p90 = scmp.ne.s32.totalorder %s85, %s87
      %p91 = scmp.eq.s32.totalorder %s16, 0
      %p92 = por %p90, %p91
      %p93 = scmp.ne.s32.totalorder %s85, %s87
      %p94 = scmp.eq.s32.totalorder %s21, 3
      %p95 = por %p93, %p94
      %p96 = scmp.ne.s32.totalorder %s87, %s88
      %p97 = scmp.eq.s32.totalorder %s21, 0
      %p98 = por %p96, %p97
      %p99 = scmp.ne.s32.totalorder %s87, %s88
      %p100 = scmp.eq.s32.totalorder %s22, 3
      %p101 = por %p99, %p100
      %p103 = scmp.ne.s32.totalorder %s88, %s102
      %p104 = scmp.eq.s32.totalorder %s22, 0
      %p105 = por %p103, %p104
      %s106 = ssub.s32 %s23, %s35
      %p107 = scmp.eq.s32.totalorder %s106, 0
      %s109 = sadd.s32 %s108, 1
      %s110 = scalar_select %p107, %s108, %s109
      %p113 = pneg %p107
      %p114 = scmp.eq.s32.totalorder %s16, 3
      %p115 = por %p113, %p114
      %p116 = scmp.ne.s32.totalorder %s108, %s111
      %p117 = scmp.eq.s32.totalorder %s16, 0
      %p118 = por %p116, %p117
      %p119 = scmp.ne.s32.totalorder %s108, %s111
      %p120 = scmp.eq.s32.totalorder %s21, 3
      %p121 = por %p119, %p120
      %p122 = scmp.ne.s32.totalorder %s111, %s112
      %p123 = scmp.eq.s32.totalorder %s21, 0
      %p124 = por %p122, %p123
      %p125 = scmp.ne.s32.totalorder %s111, %s112
      %p126 = scmp.eq.s32.totalorder %s22, 3
      %p127 = por %p125, %p126
      %p129 = scmp.ne.s32.totalorder %s112, %s128
      %p130 = scmp.eq.s32.totalorder %s22, 0
      %p131 = por %p129, %p130
      %p132 = scmp.le.s32.totalorder 1, %s16
      %p133 = scmp.lt.s32.totalorder %s16, 5
      %p134 = pnand %p132, %p133
      %p135 = pneg %p134
      // Predicated region
      $region9: #{tpu_custom_call.1} parent=5 // pred_check
        _
      $region10: #{tpu_custom_call.1} parent=5 // pred_check_branch
        %137 = sbr.rel (%p134) target = $region12
      $region11: #{tpu_custom_call.1} parent=5 // pred_region
        %s138 = ssub.s32 %s16, 1
        // Predicated region
        $region13: #{tpu_custom_call.1} parent=11 // pred_check
          %p139 = pneg %p77
        $region14: #{tpu_custom_call.1} parent=11 // pred_check_branch
          %141 = sbr.rel (%p139) target = $region16
        $region15: #{tpu_custom_call.1} parent=11 // pred_region
          %s143 = ssub.s32 1024, 1024
          %144 = vsyncadd [#allocation6], %s143
          %s145 = sshll.u32 [#allocation5], 4
          %s146 = int_to_ptr.vmem [resolvable:$true] %s145
          %151 = dma.hbm_to_vmem [thread:$0]  %s1, 1024, %s146, [#allocation6], 128, 128, 8
        $region16: #{tpu_custom_call.1} parent=11 // pred_fallthru
          _
        // Predicated region
        $region17: #{tpu_custom_call.1} parent=11 // pred_check
          %p152 = pneg %p98
        $region18: #{tpu_custom_call.1} parent=11 // pred_check_branch
          %154 = sbr.rel (%p152) target = $region20
        $region19: #{tpu_custom_call.1} parent=11 // pred_region
          %s156 = ssub.s32 512, 512
          %157 = vsyncadd [#allocation6], %s156
          %s158 = sshll.u32 [#allocation7], 4
          %s159 = int_to_ptr.vmem [resolvable:$true] %s158
          %164 = dma.hbm_to_vmem [thread:$0]  %s2, 512, %s159, [#allocation6], 128, 128, 8
        $region20: #{tpu_custom_call.1} parent=11 // pred_fallthru
          _
      $region12: #{tpu_custom_call.1} parent=5 // pred_fallthru
        _
      %p165 = scmp.lt.s32.totalorder %s16, 4
      // Predicated region
      $region21: #{tpu_custom_call.1} parent=5 // pred_check
        %p166 = pneg %p165
      $region22: #{tpu_custom_call.1} parent=5 // pred_check_branch
        %168 = sbr.rel (%p166) target = $region24
      $region23: #{tpu_custom_call.1} parent=5 // pred_region
        // Predicated region
        $region25: #{tpu_custom_call.1} parent=23 // pred_check
          %p169 = pneg %p50
        $region26: #{tpu_custom_call.1} parent=23 // pred_check_branch
          %171 = sbr.rel (%p169) target = $region28
        $region27: #{tpu_custom_call.1} parent=23 // pred_region
          %s172 = sand.u32 %s40, 1
          %s173 = scalar_lea.sflag [#allocation3], %s172
          %s174 = sand.u32 %s40, 1
          %s175 = smul.addr %s174, 25
          %s176 = scalar_lea.vmem [#allocation2], %s175
          %s178 = ssub.s32 400, 400
          %179 = vsyncadd %s173, %s178
          %s180 = smul.addr %s24, 25
          %s181 = smul.addr %s23, 50
          %s182 = sadd.s32 %s180, %s181
          %s183 = smul.addr %s182, 16
          %s184 = scalar_lea.hbm %s0, %s183
          %s185 = sshll.u32 %s176, 4
          %s186 = int_to_ptr.vmem [resolvable:$true] %s185
          %191 = dma.hbm_to_vmem [thread:$0]  %s184, 400, %s186, %s173, 80, 80, 5
        $region28: #{tpu_custom_call.1} parent=23 // pred_fallthru
          _
      $region24: #{tpu_custom_call.1} parent=5 // pred_fallthru
        _
      %p192 = scmp.le.s32.totalorder 1, %s16
      %p193 = scmp.lt.s32.totalorder %s16, 5
      %p194 = pnand %p192, %p193
      %p195 = pneg %p194
      // Predicated region
      $region29: #{tpu_custom_call.1} parent=5 // pred_check
        _
      $region30: #{tpu_custom_call.1} parent=5 // pred_check_branch
        %197 = sbr.rel (%p194) target = $region32
      $region31: #{tpu_custom_call.1} parent=5 // pred_region
        %s198 = ssub.s32 %s16, 1
        %s199 = sand.u32 %s43, 1
        %s200 = scalar_lea.sflag [#allocation3], %s199
        %s201 = sand.u32 %s43, 1
        %s202 = smul.addr %s201, 25
        %s203 = scalar_lea.vmem [#allocation2], %s202
        // Predicated region
        $region33: #{tpu_custom_call.1} parent=31 // pred_check
          %p204 = pneg %p56
        $region34: #{tpu_custom_call.1} parent=31 // pred_check_branch
          %206 = sbr.rel (%p204) target = $region36
        $region35: #{tpu_custom_call.1} parent=31 // pred_region
          %207 = dma.done %s200, 400
        $region36: #{tpu_custom_call.1} parent=31 // pred_fallthru
          _
        // Predicated region
        $region37: #{tpu_custom_call.1} parent=31 // pred_check
          %p208 = pneg %p77
        $region38: #{tpu_custom_call.1} parent=31 // pred_check_branch
          %210 = sbr.rel (%p208) target = $region40
        $region39: #{tpu_custom_call.1} parent=31 // pred_region
          %211 = dma.done [#allocation6], 1024
        $region40: #{tpu_custom_call.1} parent=31 // pred_fallthru
          _
        // Predicated region
        $region41: #{tpu_custom_call.1} parent=31 // pred_check
          %p212 = pneg %p98
        $region42: #{tpu_custom_call.1} parent=31 // pred_check_branch
          %214 = sbr.rel (%p212) target = $region44
        $region43: #{tpu_custom_call.1} parent=31 // pred_region
          %215 = dma.done [#allocation6], 512
        $region44: #{tpu_custom_call.1} parent=31 // pred_fallthru
          _
        %s216 = sand.u32 %s43, 1
        %s217 = scalar_lea.sflag [#allocation3], %s216
        %s218 = sand.u32 %s43, 1
        %s219 = smul.addr %s218, 25
        %s220 = scalar_lea.vmem [#allocation2], %s219
        %p221 = pneg %p56
        %p222 = pneg %p53
        %p223 = pneg %p77
        %p224 = pneg %p74
        %p225 = pneg %p98
        %p226 = pneg %p95
        %p227 = pneg %p124
        %p228 = pneg %p121
        %s229 = sand.u32 %s111, 1
        %s230 = scalar_lea.sflag [#allocation4], %s229
        %s231 = sand.u32 %s111, 1
        %s232 = smul.addr %s231, 32
        %s233 = scalar_lea.vmem [#allocation8], %s232
        %v234 = vld [vmem:[%s203] sm:$0x1f]
        %v235 = vld [vmem:[%s203 + $0x5] sm:$0x1f]
        %v236 = vld [vmem:[%s203 + $0xa] sm:$0x1f]
        %v237 = vld [vmem:[%s203 + $0xf] sm:$0x1f]
        %v238 = vld [vmem:[%s203 + $0x14] sm:$0x1f]
        %v239 = vld [vmem:[#allocation5] sm:$0xff]
        %v240 = vld [vmem:[#allocation5 + $0x8] sm:$0xff]
        %v241 = vld [vmem:[#allocation5 + $0x10] sm:$0xff]
        %v242 = vld [vmem:[#allocation5 + $0x18] sm:$0xff]
        %244 = vset.pattern.permute.xlu0 0
        %245 = vperm.xlu0 %244, %v239
        %v246 = vpop.permute.xlu0 %245
        %249 = vset.pattern.permute.xlu0 0
        %250 = vperm.xlu0 %249, %v240
        %v251 = vpop.permute.xlu0 %250
        %254 = vset.pattern.permute.xlu0 0
        %255 = vperm.xlu0 %254, %v241
        %v256 = vpop.permute.xlu0 %255
        %259 = vset.pattern.permute.xlu0 0
        %260 = vperm.xlu0 %259, %v242
        %v261 = vpop.permute.xlu0 %260
        %v264 = vlaneseq
        %v265 = vshrl.u32 %v264, 7
        %v266 = vsub.s32 0, %v265
        %v267 = vrot.slane %v234, %v266
        %v268 = vlaneseq
        %v269 = vshrl.u32 %v268, 7
        %v270 = vsub.s32 1, %v269
        %v271 = vrot.slane %v234, %v270
        %v272 = vlaneseq
        %v273 = vshrl.u32 %v272, 7
        %v274 = vsub.s32 2, %v273
        %v275 = vrot.slane %v234, %v274
        %v276 = vlaneseq
        %v277 = vshrl.u32 %v276, 7
        %v278 = vsub.s32 3, %v277
        %v279 = vrot.slane %v234, %v278
        %v284 = vmul.f32 %v246, %v267
        %v285 = vmul.f32 %v246, %v271
        %v286 = vmul.f32 %v246, %v275
        %v287 = vmul.f32 %v246, %v279
        %v288 = vmul.f32 %v251, %v267
        %v289 = vmul.f32 %v251, %v271
        %v290 = vmul.f32 %v251, %v275
        %v291 = vmul.f32 %v251, %v279
        %v292 = vmul.f32 %v256, %v267
        %v293 = vmul.f32 %v256, %v271
        %v294 = vmul.f32 %v256, %v275
        %v295 = vmul.f32 %v256, %v279
        %v296 = vmul.f32 %v261, %v267
        %v297 = vmul.f32 %v261, %v271
        %v298 = vmul.f32 %v261, %v275
        %v299 = vmul.f32 %v261, %v279
        %v300 = vadd.f32 %v284, 0.0
        %v301 = vadd.f32 %v285, 0.0
        %v302 = vadd.f32 %v286, 0.0
        %v303 = vadd.f32 %v287, 0.0
        %v304 = vadd.f32 %v288, 0.0
        %v305 = vadd.f32 %v289, 0.0
        %v306 = vadd.f32 %v290, 0.0
        %v307 = vadd.f32 %v291, 0.0
        %v308 = vadd.f32 %v292, 0.0
        %v309 = vadd.f32 %v293, 0.0
        %v310 = vadd.f32 %v294, 0.0
        %v311 = vadd.f32 %v295, 0.0
        %v312 = vadd.f32 %v296, 0.0
        %v313 = vadd.f32 %v297, 0.0
        %v314 = vadd.f32 %v298, 0.0
        %v315 = vadd.f32 %v299, 0.0
        %316 = vset.pattern.permute.xlu0 1
        %317 = vperm.xlu0 %316, %v239
        %v318 = vpop.permute.xlu0 %317
        %320 = vset.pattern.permute.xlu0 1
        %321 = vperm.xlu0 %320, %v240
        %v322 = vpop.permute.xlu0 %321
        %324 = vset.pattern.permute.xlu0 1
        %325 = vperm.xlu0 %324, %v241
        %v326 = vpop.permute.xlu0 %325
        %328 = vset.pattern.permute.xlu0 1
        %329 = vperm.xlu0 %328, %v242
        %v330 = vpop.permute.xlu0 %329
        %v333 = vlaneseq
        %v334 = vshrl.u32 %v333, 7
        %v335 = vsub.s32 0, %v334
        %v336 = vrot.slane %v235, %v335
        %v337 = vlaneseq
        %v338 = vshrl.u32 %v337, 7
        %v339 = vsub.s32 1, %v338
        %v340 = vrot.slane %v235, %v339
        %v341 = vlaneseq
        %v342 = vshrl.u32 %v341, 7
        %v343 = vsub.s32 2, %v342
        %v344 = vrot.slane %v235, %v343
        %v345 = vlaneseq
        %v346 = vshrl.u32 %v345, 7
        %v347 = vsub.s32 3, %v346
        %v348 = vrot.slane %v235, %v347
        %v353 = vmul.f32 %v318, %v336
        %v354 = vmul.f32 %v318, %v340
        %v355 = vmul.f32 %v318, %v344
        %v356 = vmul.f32 %v318, %v348
        %v357 = vmul.f32 %v322, %v336
        %v358 = vmul.f32 %v322, %v340
        %v359 = vmul.f32 %v322, %v344
        %v360 = vmul.f32 %v322, %v348
        %v361 = vmul.f32 %v326, %v336
        %v362 = vmul.f32 %v326, %v340
        %v363 = vmul.f32 %v326, %v344
        %v364 = vmul.f32 %v326, %v348
        %v365 = vmul.f32 %v330, %v336
        %v366 = vmul.f32 %v330, %v340
        %v367 = vmul.f32 %v330, %v344
        %v368 = vmul.f32 %v330, %v348
        %v369 = vadd.f32 %v300, %v353
        %v370 = vadd.f32 %v301, %v354
        %v371 = vadd.f32 %v302, %v355
        %v372 = vadd.f32 %v303, %v356
        %v373 = vadd.f32 %v304, %v357
        %v374 = vadd.f32 %v305, %v358
        %v375 = vadd.f32 %v306, %v359
        %v376 = vadd.f32 %v307, %v360
        %v377 = vadd.f32 %v308, %v361
        %v378 = vadd.f32 %v309, %v362
        %v379 = vadd.f32 %v310, %v363
        %v380 = vadd.f32 %v311, %v364
        %v381 = vadd.f32 %v312, %v365
        %v382 = vadd.f32 %v313, %v366
        %v383 = vadd.f32 %v314, %v367
        %v384 = vadd.f32 %v315, %v368
        %385 = vset.pattern.permute.xlu0 2
        %386 = vperm.xlu0 %385, %v239
        %v387 = vpop.permute.xlu0 %386
        %389 = vset.pattern.permute.xlu0 2
        %390 = vperm.xlu0 %389, %v240
        %v391 = vpop.permute.xlu0 %390
        %393 = vset.pattern.permute.xlu0 2
        %394 = vperm.xlu0 %393, %v241
        %v395 = vpop.permute.xlu0 %394
        %397 = vset.pattern.permute.xlu0 2
        %398 = vperm.xlu0 %397, %v242
        %v399 = vpop.permute.xlu0 %398
        %v402 = vlaneseq
        %v403 = vshrl.u32 %v402, 7
        %v404 = vsub.s32 0, %v403
        %v405 = vrot.slane %v236, %v404
        %v406 = vlaneseq
        %v407 = vshrl.u32 %v406, 7
        %v408 = vsub.s32 1, %v407
        %v409 = vrot.slane %v236, %v408
        %v410 = vlaneseq
        %v411 = vshrl.u32 %v410, 7
        %v412 = vsub.s32 2, %v411
        %v413 = vrot.slane %v236, %v412
        %v414 = vlaneseq
        %v415 = vshrl.u32 %v414, 7
        %v416 = vsub.s32 3, %v415
        %v417 = vrot.slane %v236, %v416
        %v422 = vmul.f32 %v387, %v405
        %v423 = vmul.f32 %v387, %v409
        %v424 = vmul.f32 %v387, %v413
        %v425 = vmul.f32 %v387, %v417
        %v426 = vmul.f32 %v391, %v405
        %v427 = vmul.f32 %v391, %v409
        %v428 = vmul.f32 %v391, %v413
        %v429 = vmul.f32 %v391, %v417
        %v430 = vmul.f32 %v395, %v405
        %v431 = vmul.f32 %v395, %v409
        %v432 = vmul.f32 %v395, %v413
        %v433 = vmul.f32 %v395, %v417
        %v434 = vmul.f32 %v399, %v405
        %v435 = vmul.f32 %v399, %v409
        %v436 = vmul.f32 %v399, %v413
        %v437 = vmul.f32 %v399, %v417
        %v438 = vadd.f32 %v369, %v422
        %v439 = vadd.f32 %v370, %v423
        %v440 = vadd.f32 %v371, %v424
        %v441 = vadd.f32 %v372, %v425
        %v442 = vadd.f32 %v373, %v426
        %v443 = vadd.f32 %v374, %v427
        %v444 = vadd.f32 %v375, %v428
        %v445 = vadd.f32 %v376, %v429
        %v446 = vadd.f32 %v377, %v430
        %v447 = vadd.f32 %v378, %v431
        %v448 = vadd.f32 %v379, %v432
        %v449 = vadd.f32 %v380, %v433
        %v450 = vadd.f32 %v381, %v434
        %v451 = vadd.f32 %v382, %v435
        %v452 = vadd.f32 %v383, %v436
        %v453 = vadd.f32 %v384, %v437
        %454 = vset.pattern.permute.xlu0 3
        %455 = vperm.xlu0 %454, %v239
        %v456 = vpop.permute.xlu0 %455
        %458 = vset.pattern.permute.xlu0 3
        %459 = vperm.xlu0 %458, %v240
        %v460 = vpop.permute.xlu0 %459
        %462 = vset.pattern.permute.xlu0 3
        %463 = vperm.xlu0 %462, %v241
        %v464 = vpop.permute.xlu0 %463
        %466 = vset.pattern.permute.xlu0 3
        %467 = vperm.xlu0 %466, %v242
        %v468 = vpop.permute.xlu0 %467
        %v471 = vlaneseq
        %v472 = vshrl.u32 %v471, 7
        %v473 = vsub.s32 0, %v472
        %v474 = vrot.slane %v237, %v473
        %v475 = vlaneseq
        %v476 = vshrl.u32 %v475, 7
        %v477 = vsub.s32 1, %v476
        %v478 = vrot.slane %v237, %v477
        %v479 = vlaneseq
        %v480 = vshrl.u32 %v479, 7
        %v481 = vsub.s32 2, %v480
        %v482 = vrot.slane %v237, %v481
        %v483 = vlaneseq
        %v484 = vshrl.u32 %v483, 7
        %v485 = vsub.s32 3, %v484
        %v486 = vrot.slane %v237, %v485
        %v491 = vmul.f32 %v456, %v474
        %v492 = vmul.f32 %v456, %v478
        %v493 = vmul.f32 %v456, %v482
        %v494 = vmul.f32 %v456, %v486
        %v495 = vmul.f32 %v460, %v474
        %v496 = vmul.f32 %v460, %v478
        %v497 = vmul.f32 %v460, %v482
        %v498 = vmul.f32 %v460, %v486
        %v499 = vmul.f32 %v464, %v474
        %v500 = vmul.f32 %v464, %v478
        %v501 = vmul.f32 %v464, %v482
        %v502 = vmul.f32 %v464, %v486
        %v503 = vmul.f32 %v468, %v474
        %v504 = vmul.f32 %v468, %v478
        %v505 = vmul.f32 %v468, %v482
        %v506 = vmul.f32 %v468, %v486
        %v507 = vadd.f32 %v438, %v491
        %v508 = vadd.f32 %v439, %v492
        %v509 = vadd.f32 %v440, %v493
        %v510 = vadd.f32 %v441, %v494
        %v511 = vadd.f32 %v442, %v495
        %v512 = vadd.f32 %v443, %v496
        %v513 = vadd.f32 %v444, %v497
        %v514 = vadd.f32 %v445, %v498
        %v515 = vadd.f32 %v446, %v499
        %v516 = vadd.f32 %v447, %v500
        %v517 = vadd.f32 %v448, %v501
        %v518 = vadd.f32 %v449, %v502
        %v519 = vadd.f32 %v450, %v503
        %v520 = vadd.f32 %v451, %v504
        %v521 = vadd.f32 %v452, %v505
        %v522 = vadd.f32 %v453, %v506
        %523 = vset.pattern.permute.xlu0 4
        %524 = vperm.xlu0 %523, %v239
        %v525 = vpop.permute.xlu0 %524
        %527 = vset.pattern.permute.xlu0 4
        %528 = vperm.xlu0 %527, %v240
        %v529 = vpop.permute.xlu0 %528
        %531 = vset.pattern.permute.xlu0 4
        %532 = vperm.xlu0 %531, %v241
        %v533 = vpop.permute.xlu0 %532
        %535 = vset.pattern.permute.xlu0 4
        %536 = vperm.xlu0 %535, %v242
        %v537 = vpop.permute.xlu0 %536
        %v540 = vlaneseq
        %v541 = vshrl.u32 %v540, 7
        %v542 = vsub.s32 0, %v541
        %v543 = vrot.slane %v238, %v542
        %v544 = vlaneseq
        %v545 = vshrl.u32 %v544, 7
        %v546 = vsub.s32 1, %v545
        %v547 = vrot.slane %v238, %v546
        %v548 = vlaneseq
        %v549 = vshrl.u32 %v548, 7
        %v550 = vsub.s32 2, %v549
        %v551 = vrot.slane %v238, %v550
        %v552 = vlaneseq
        %v553 = vshrl.u32 %v552, 7
        %v554 = vsub.s32 3, %v553
        %v555 = vrot.slane %v238, %v554
        %v560 = vmul.f32 %v525, %v543
        %v561 = vmul.f32 %v525, %v547
        %v562 = vmul.f32 %v525, %v551
        %v563 = vmul.f32 %v525, %v555
        %v564 = vmul.f32 %v529, %v543
        %v565 = vmul.f32 %v529, %v547
        %v566 = vmul.f32 %v529, %v551
        %v567 = vmul.f32 %v529, %v555
        %v568 = vmul.f32 %v533, %v543
        %v569 = vmul.f32 %v533, %v547
        %v570 = vmul.f32 %v533, %v551
        %v571 = vmul.f32 %v533, %v555
        %v572 = vmul.f32 %v537, %v543
        %v573 = vmul.f32 %v537, %v547
        %v574 = vmul.f32 %v537, %v551
        %v575 = vmul.f32 %v537, %v555
        %v576 = vadd.f32 %v507, %v560
        %v577 = vadd.f32 %v508, %v561
        %v578 = vadd.f32 %v509, %v562
        %v579 = vadd.f32 %v510, %v563
        %v580 = vadd.f32 %v511, %v564
        %v581 = vadd.f32 %v512, %v565
        %v582 = vadd.f32 %v513, %v566
        %v583 = vadd.f32 %v514, %v567
        %v584 = vadd.f32 %v515, %v568
        %v585 = vadd.f32 %v516, %v569
        %v586 = vadd.f32 %v517, %v570
        %v587 = vadd.f32 %v518, %v571
        %v588 = vadd.f32 %v519, %v572
        %v589 = vadd.f32 %v520, %v573
        %v590 = vadd.f32 %v521, %v574
        %v591 = vadd.f32 %v522, %v575
        %s592 = scalar_lea.vmem [#allocation5], 32
        %v593 = vld [vmem:[%s592] sm:$0xff]
        %v594 = vld [vmem:[%s592 + $0x8] sm:$0xff]
        %v595 = vld [vmem:[%s592 + $0x10] sm:$0xff]
        %v596 = vld [vmem:[%s592 + $0x18] sm:$0xff]
        %598 = vset.pattern.permute.xlu0 0
        %599 = vperm.xlu0 %598, %v593
        %v600 = vpop.permute.xlu0 %599
        %603 = vset.pattern.permute.xlu0 0
        %604 = vperm.xlu0 %603, %v594
        %v605 = vpop.permute.xlu0 %604
        %608 = vset.pattern.permute.xlu0 0
        %609 = vperm.xlu0 %608, %v595
        %v610 = vpop.permute.xlu0 %609
        %613 = vset.pattern.permute.xlu0 0
        %614 = vperm.xlu0 %613, %v596
        %v615 = vpop.permute.xlu0 %614
        %v617 = vlaneseq
        %v618 = vshrl.u32 %v617, 7
        %v619 = vsub.s32 4, %v618
        %v620 = vrot.slane %v234, %v619
        %v622 = vmul.f32 %v600, %v267
        %v623 = vmul.f32 %v600, %v271
        %v624 = vmul.f32 %v600, %v275
        %v625 = vmul.f32 %v600, %v279
        %v626 = vmul.f32 %v600, %v620
        %v627 = vmul.f32 %v605, %v267
        %v628 = vmul.f32 %v605, %v271
        %v629 = vmul.f32 %v605, %v275
        %v630 = vmul.f32 %v605, %v279
        %v631 = vmul.f32 %v605, %v620
        %v632 = vmul.f32 %v610, %v267
        %v633 = vmul.f32 %v610, %v271
        %v634 = vmul.f32 %v610, %v275
        %v635 = vmul.f32 %v610, %v279
        %v636 = vmul.f32 %v610, %v620
        %v637 = vmul.f32 %v615, %v267
        %v638 = vmul.f32 %v615, %v271
        %v639 = vmul.f32 %v615, %v275
        %v640 = vmul.f32 %v615, %v279
        %v641 = vmul.f32 %v615, %v620
        %662 = vrot.lane.b32.xlu0 %v622, 127
        %v663 = vpop.permute.xlu0 %662
        %664 = vrot.lane.b32.xlu0 %v623, 127
        %v665 = vpop.permute.xlu0 %664
        %666 = vrot.lane.b32.xlu0 %v624, 127
        %v667 = vpop.permute.xlu0 %666
        %668 = vrot.lane.b32.xlu0 %v625, 127
        %v669 = vpop.permute.xlu0 %668
        %670 = vrot.lane.b32.xlu0 %v626, 127
        %v671 = vpop.permute.xlu0 %670
        %672 = vrot.lane.b32.xlu0 %v627, 127
        %v673 = vpop.permute.xlu0 %672
        %674 = vrot.lane.b32.xlu0 %v628, 127
        %v675 = vpop.permute.xlu0 %674
        %676 = vrot.lane.b32.xlu0 %v629, 127
        %v677 = vpop.permute.xlu0 %676
        %678 = vrot.lane.b32.xlu0 %v630, 127
        %v679 = vpop.permute.xlu0 %678
        %680 = vrot.lane.b32.xlu0 %v631, 127
        %v681 = vpop.permute.xlu0 %680
        %682 = vrot.lane.b32.xlu0 %v632, 127
        %v683 = vpop.permute.xlu0 %682
        %684 = vrot.lane.b32.xlu0 %v633, 127
        %v685 = vpop.permute.xlu0 %684
        %686 = vrot.lane.b32.xlu0 %v634, 127
        %v687 = vpop.permute.xlu0 %686
        %688 = vrot.lane.b32.xlu0 %v635, 127
        %v689 = vpop.permute.xlu0 %688
        %690 = vrot.lane.b32.xlu0 %v636, 127
        %v691 = vpop.permute.xlu0 %690
        %692 = vrot.lane.b32.xlu0 %v637, 127
        %v693 = vpop.permute.xlu0 %692
        %694 = vrot.lane.b32.xlu0 %v638, 127
        %v695 = vpop.permute.xlu0 %694
        %696 = vrot.lane.b32.xlu0 %v639, 127
        %v697 = vpop.permute.xlu0 %696
        %698 = vrot.lane.b32.xlu0 %v640, 127
        %v699 = vpop.permute.xlu0 %698
        %700 = vrot.lane.b32.xlu0 %v641, 127
        %v701 = vpop.permute.xlu0 %700
        %vm702 = vcmask 1039360
        %v703 = vsel %vm702, %v663, %v665
        %v704 = vsel %vm702, %v665, %v667
        %v705 = vsel %vm702, %v667, %v669
        %v706 = vsel %vm702, %v669, %v671
        %v707 = vsel %vm702, %v673, %v675
        %v708 = vsel %vm702, %v675, %v677
        %v709 = vsel %vm702, %v677, %v679
        %v710 = vsel %vm702, %v679, %v681
        %v711 = vsel %vm702, %v683, %v685
        %v712 = vsel %vm702, %v685, %v687
        %v713 = vsel %vm702, %v687, %v689
        %v714 = vsel %vm702, %v689, %v691
        %v715 = vsel %vm702, %v693, %v695
        %v716 = vsel %vm702, %v695, %v697
        %v717 = vsel %vm702, %v697, %v699
        %v718 = vsel %vm702, %v699, %v701
        %v735 = vadd.f32 %v576, %v703
        %v736 = vadd.f32 %v577, %v704
        %v737 = vadd.f32 %v578, %v705
        %v738 = vadd.f32 %v579, %v706
        %v739 = vadd.f32 %v580, %v707
        %v740 = vadd.f32 %v581, %v708
        %v741 = vadd.f32 %v582, %v709
        %v742 = vadd.f32 %v583, %v710
        %v743 = vadd.f32 %v584, %v711
        %v744 = vadd.f32 %v585, %v712
        %v745 = vadd.f32 %v586, %v713
        %v746 = vadd.f32 %v587, %v714
        %v747 = vadd.f32 %v588, %v715
        %v748 = vadd.f32 %v589, %v716
        %v749 = vadd.f32 %v590, %v717
        %v750 = vadd.f32 %v591, %v718
        %751 = vset.pattern.permute.xlu0 1
        %752 = vperm.xlu0 %751, %v593
        %v753 = vpop.permute.xlu0 %752
        %755 = vset.pattern.permute.xlu0 1
        %756 = vperm.xlu0 %755, %v594
        %v757 = vpop.permute.xlu0 %756
        %759 = vset.pattern.permute.xlu0 1
        %760 = vperm.xlu0 %759, %v595
        %v761 = vpop.permute.xlu0 %760
        %763 = vset.pattern.permute.xlu0 1
        %764 = vperm.xlu0 %763, %v596
        %v765 = vpop.permute.xlu0 %764
        %v767 = vlaneseq
        %v768 = vshrl.u32 %v767, 7
        %v769 = vsub.s32 4, %v768
        %v770 = vrot.slane %v235, %v769
        %v772 = vmul.f32 %v753, %v336
        %v773 = vmul.f32 %v753, %v340
        %v774 = vmul.f32 %v753, %v344
        %v775 = vmul.f32 %v753, %v348
        %v776 = vmul.f32 %v753, %v770
        %v777 = vmul.f32 %v757, %v336
        %v778 = vmul.f32 %v757, %v340
        %v779 = vmul.f32 %v757, %v344
        %v780 = vmul.f32 %v757, %v348
        %v781 = vmul.f32 %v757, %v770
        %v782 = vmul.f32 %v761, %v336
        %v783 = vmul.f32 %v761, %v340
        %v784 = vmul.f32 %v761, %v344
        %v785 = vmul.f32 %v761, %v348
        %v786 = vmul.f32 %v761, %v770
        %v787 = vmul.f32 %v765, %v336
        %v788 = vmul.f32 %v765, %v340
        %v789 = vmul.f32 %v765, %v344
        %v790 = vmul.f32 %v765, %v348
        %v791 = vmul.f32 %v765, %v770
        %812 = vrot.lane.b32.xlu0 %v772, 127
        %v813 = vpop.permute.xlu0 %812
        %814 = vrot.lane.b32.xlu0 %v773, 127
        %v815 = vpop.permute.xlu0 %814
        %816 = vrot.lane.b32.xlu0 %v774, 127
        %v817 = vpop.permute.xlu0 %816
        %818 = vrot.lane.b32.xlu0 %v775, 127
        %v819 = vpop.permute.xlu0 %818
        %820 = vrot.lane.b32.xlu0 %v776, 127
        %v821 = vpop.permute.xlu0 %820
        %822 = vrot.lane.b32.xlu0 %v777, 127
        %v823 = vpop.permute.xlu0 %822
        %824 = vrot.lane.b32.xlu0 %v778, 127
        %v825 = vpop.permute.xlu0 %824
        %826 = vrot.lane.b32.xlu0 %v779, 127
        %v827 = vpop.permute.xlu0 %826
        %828 = vrot.lane.b32.xlu0 %v780, 127
        %v829 = vpop.permute.xlu0 %828
        %830 = vrot.lane.b32.xlu0 %v781, 127
        %v831 = vpop.permute.xlu0 %830
        %832 = vrot.lane.b32.xlu0 %v782, 127
        %v833 = vpop.permute.xlu0 %832
        %834 = vrot.lane.b32.xlu0 %v783, 127
        %v835 = vpop.permute.xlu0 %834
        %836 = vrot.lane.b32.xlu0 %v784, 127
        %v837 = vpop.permute.xlu0 %836
        %838 = vrot.lane.b32.xlu0 %v785, 127
        %v839 = vpop.permute.xlu0 %838
        %840 = vrot.lane.b32.xlu0 %v786, 127
        %v841 = vpop.permute.xlu0 %840
        %842 = vrot.lane.b32.xlu0 %v787, 127
        %v843 = vpop.permute.xlu0 %842
        %844 = vrot.lane.b32.xlu0 %v788, 127
        %v845 = vpop.permute.xlu0 %844
        %846 = vrot.lane.b32.xlu0 %v789, 127
        %v847 = vpop.permute.xlu0 %846
        %848 = vrot.lane.b32.xlu0 %v790, 127
        %v849 = vpop.permute.xlu0 %848
        %850 = vrot.lane.b32.xlu0 %v791, 127
        %v851 = vpop.permute.xlu0 %850
        %v852 = vsel %vm702, %v813, %v815
        %v853 = vsel %vm702, %v815, %v817
        %v854 = vsel %vm702, %v817, %v819
        %v855 = vsel %vm702, %v819, %v821
        %v856 = vsel %vm702, %v823, %v825
        %v857 = vsel %vm702, %v825, %v827
        %v858 = vsel %vm702, %v827, %v829
        %v859 = vsel %vm702, %v829, %v831
        %v860 = vsel %vm702, %v833, %v835
        %v861 = vsel %vm702, %v835, %v837
        %v862 = vsel %vm702, %v837, %v839
        %v863 = vsel %vm702, %v839, %v841
        %v864 = vsel %vm702, %v843, %v845
        %v865 = vsel %vm702, %v845, %v847
        %v866 = vsel %vm702, %v847, %v849
        %v867 = vsel %vm702, %v849, %v851
        %v884 = vadd.f32 %v735, %v852
        %v885 = vadd.f32 %v736, %v853
        %v886 = vadd.f32 %v737, %v854
        %v887 = vadd.f32 %v738, %v855
        %v888 = vadd.f32 %v739, %v856
        %v889 = vadd.f32 %v740, %v857
        %v890 = vadd.f32 %v741, %v858
        %v891 = vadd.f32 %v742, %v859
        %v892 = vadd.f32 %v743, %v860
        %v893 = vadd.f32 %v744, %v861
        %v894 = vadd.f32 %v745, %v862
        %v895 = vadd.f32 %v746, %v863
        %v896 = vadd.f32 %v747, %v864
        %v897 = vadd.f32 %v748, %v865
        %v898 = vadd.f32 %v749, %v866
        %v899 = vadd.f32 %v750, %v867
        %900 = vset.pattern.permute.xlu0 2
        %901 = vperm.xlu0 %900, %v593
        %v902 = vpop.permute.xlu0 %901
        %904 = vset.pattern.permute.xlu0 2
        %905 = vperm.xlu0 %904, %v594
        %v906 = vpop.permute.xlu0 %905
        %908 = vset.pattern.permute.xlu0 2
        %909 = vperm.xlu0 %908, %v595
        %v910 = vpop.permute.xlu0 %909
        %912 = vset.pattern.permute.xlu0 2
        %913 = vperm.xlu0 %912, %v596
        %v914 = vpop.permute.xlu0 %913
        %v916 = vlaneseq
        %v917 = vshrl.u32 %v916, 7
        %v918 = vsub.s32 4, %v917
        %v919 = vrot.slane %v236, %v918
        %v921 = vmul.f32 %v902, %v405
        %v922 = vmul.f32 %v902, %v409
        %v923 = vmul.f32 %v902, %v413
        %v924 = vmul.f32 %v902, %v417
        %v925 = vmul.f32 %v902, %v919
        %v926 = vmul.f32 %v906, %v405
        %v927 = vmul.f32 %v906, %v409
        %v928 = vmul.f32 %v906, %v413
        %v929 = vmul.f32 %v906, %v417
        %v930 = vmul.f32 %v906, %v919
        %v931 = vmul.f32 %v910, %v405
        %v932 = vmul.f32 %v910, %v409
        %v933 = vmul.f32 %v910, %v413
        %v934 = vmul.f32 %v910, %v417
        %v935 = vmul.f32 %v910, %v919
        %v936 = vmul.f32 %v914, %v405
        %v937 = vmul.f32 %v914, %v409
        %v938 = vmul.f32 %v914, %v413
        %v939 = vmul.f32 %v914, %v417
        %v940 = vmul.f32 %v914, %v919
        %961 = vrot.lane.b32.xlu0 %v921, 127
        %v962 = vpop.permute.xlu0 %961
        %963 = vrot.lane.b32.xlu0 %v922, 127
        %v964 = vpop.permute.xlu0 %963
        %965 = vrot.lane.b32.xlu0 %v923, 127
        %v966 = vpop.permute.xlu0 %965
        %967 = vrot.lane.b32.xlu0 %v924, 127
        %v968 = vpop.permute.xlu0 %967
        %969 = vrot.lane.b32.xlu0 %v925, 127
        %v970 = vpop.permute.xlu0 %969
        %971 = vrot.lane.b32.xlu0 %v926, 127
        %v972 = vpop.permute.xlu0 %971
        %973 = vrot.lane.b32.xlu0 %v927, 127
        %v974 = vpop.permute.xlu0 %973
        %975 = vrot.lane.b32.xlu0 %v928, 127
        %v976 = vpop.permute.xlu0 %975
        %977 = vrot.lane.b32.xlu0 %v929, 127
        %v978 = vpop.permute.xlu0 %977
        %979 = vrot.lane.b32.xlu0 %v930, 127
        %v980 = vpop.permute.xlu0 %979
        %981 = vrot.lane.b32.xlu0 %v931, 127
        %v982 = vpop.permute.xlu0 %981
        %983 = vrot.lane.b32.xlu0 %v932, 127
        %v984 = vpop.permute.xlu0 %983
        %985 = vrot.lane.b32.xlu0 %v933, 127
        %v986 = vpop.permute.xlu0 %985
        %987 = vrot.lane.b32.xlu0 %v934, 127
        %v988 = vpop.permute.xlu0 %987
        %989 = vrot.lane.b32.xlu0 %v935, 127
        %v990 = vpop.permute.xlu0 %989
        %991 = vrot.lane.b32.xlu0 %v936, 127
        %v992 = vpop.permute.xlu0 %991
        %993 = vrot.lane.b32.xlu0 %v937, 127
        %v994 = vpop.permute.xlu0 %993
        %995 = vrot.lane.b32.xlu0 %v938, 127
        %v996 = vpop.permute.xlu0 %995
        %997 = vrot.lane.b32.xlu0 %v939, 127
        %v998 = vpop.permute.xlu0 %997
        %999 = vrot.lane.b32.xlu0 %v940, 127
        %v1000 = vpop.permute.xlu0 %999
        %v1001 = vsel %vm702, %v962, %v964
        %v1002 = vsel %vm702, %v964, %v966
        %v1003 = vsel %vm702, %v966, %v968
        %v1004 = vsel %vm702, %v968, %v970
        %v1005 = vsel %vm702, %v972, %v974
        %v1006 = vsel %vm702, %v974, %v976
        %v1007 = vsel %vm702, %v976, %v978
        %v1008 = vsel %vm702, %v978, %v980
        %v1009 = vsel %vm702, %v982, %v984
        %v1010 = vsel %vm702, %v984, %v986
        %v1011 = vsel %vm702, %v986, %v988
        %v1012 = vsel %vm702, %v988, %v990
        %v1013 = vsel %vm702, %v992, %v994
        %v1014 = vsel %vm702, %v994, %v996
        %v1015 = vsel %vm702, %v996, %v998
        %v1016 = vsel %vm702, %v998, %v1000
        %v1033 = vadd.f32 %v884, %v1001
        %v1034 = vadd.f32 %v885, %v1002
        %v1035 = vadd.f32 %v886, %v1003
        %v1036 = vadd.f32 %v887, %v1004
        %v1037 = vadd.f32 %v888, %v1005
        %v1038 = vadd.f32 %v889, %v1006
        %v1039 = vadd.f32 %v890, %v1007
        %v1040 = vadd.f32 %v891, %v1008
        %v1041 = vadd.f32 %v892, %v1009
        %v1042 = vadd.f32 %v893, %v1010
        %v1043 = vadd.f32 %v894, %v1011
        %v1044 = vadd.f32 %v895, %v1012
        %v1045 = vadd.f32 %v896, %v1013
        %v1046 = vadd.f32 %v897, %v1014
        %v1047 = vadd.f32 %v898, %v1015
        %v1048 = vadd.f32 %v899, %v1016
        %1049 = vset.pattern.permute.xlu0 3
        %1050 = vperm.xlu0 %1049, %v593
        %v1051 = vpop.permute.xlu0 %1050
        %1053 = vset.pattern.permute.xlu0 3
        %1054 = vperm.xlu0 %1053, %v594
        %v1055 = vpop.permute.xlu0 %1054
        %1057 = vset.pattern.permute.xlu0 3
        %1058 = vperm.xlu0 %1057, %v595
        %v1059 = vpop.permute.xlu0 %1058
        %1061 = vset.pattern.permute.xlu0 3
        %1062 = vperm.xlu0 %1061, %v596
        %v1063 = vpop.permute.xlu0 %1062
        %v1065 = vlaneseq
        %v1066 = vshrl.u32 %v1065, 7
        %v1067 = vsub.s32 4, %v1066
        %v1068 = vrot.slane %v237, %v1067
        %v1070 = vmul.f32 %v1051, %v474
        %v1071 = vmul.f32 %v1051, %v478
        %v1072 = vmul.f32 %v1051, %v482
        %v1073 = vmul.f32 %v1051, %v486
        %v1074 = vmul.f32 %v1051, %v1068
        %v1075 = vmul.f32 %v1055, %v474
        %v1076 = vmul.f32 %v1055, %v478
        %v1077 = vmul.f32 %v1055, %v482
        %v1078 = vmul.f32 %v1055, %v486
        %v1079 = vmul.f32 %v1055, %v1068
        %v1080 = vmul.f32 %v1059, %v474
        %v1081 = vmul.f32 %v1059, %v478
        %v1082 = vmul.f32 %v1059, %v482
        %v1083 = vmul.f32 %v1059, %v486
        %v1084 = vmul.f32 %v1059, %v1068
        %v1085 = vmul.f32 %v1063, %v474
        %v1086 = vmul.f32 %v1063, %v478
        %v1087 = vmul.f32 %v1063, %v482
        %v1088 = vmul.f32 %v1063, %v486
        %v1089 = vmul.f32 %v1063, %v1068
        %1110 = vrot.lane.b32.xlu0 %v1070, 127
        %v1111 = vpop.permute.xlu0 %1110
        %1112 = vrot.lane.b32.xlu0 %v1071, 127
        %v1113 = vpop.permute.xlu0 %1112
        %1114 = vrot.lane.b32.xlu0 %v1072, 127
        %v1115 = vpop.permute.xlu0 %1114
        %1116 = vrot.lane.b32.xlu0 %v1073, 127
        %v1117 = vpop.permute.xlu0 %1116
        %1118 = vrot.lane.b32.xlu0 %v1074, 127
        %v1119 = vpop.permute.xlu0 %1118
        %1120 = vrot.lane.b32.xlu0 %v1075, 127
        %v1121 = vpop.permute.xlu0 %1120
        %1122 = vrot.lane.b32.xlu0 %v1076, 127
        %v1123 = vpop.permute.xlu0 %1122
        %1124 = vrot.lane.b32.xlu0 %v1077, 127
        %v1125 = vpop.permute.xlu0 %1124
        %1126 = vrot.lane.b32.xlu0 %v1078, 127
        %v1127 = vpop.permute.xlu0 %1126
        %1128 = vrot.lane.b32.xlu0 %v1079, 127
        %v1129 = vpop.permute.xlu0 %1128
        %1130 = vrot.lane.b32.xlu0 %v1080, 127
        %v1131 = vpop.permute.xlu0 %1130
        %1132 = vrot.lane.b32.xlu0 %v1081, 127
        %v1133 = vpop.permute.xlu0 %1132
        %1134 = vrot.lane.b32.xlu0 %v1082, 127
        %v1135 = vpop.permute.xlu0 %1134
        %1136 = vrot.lane.b32.xlu0 %v1083, 127
        %v1137 = vpop.permute.xlu0 %1136
        %1138 = vrot.lane.b32.xlu0 %v1084, 127
        %v1139 = vpop.permute.xlu0 %1138
        %1140 = vrot.lane.b32.xlu0 %v1085, 127
        %v1141 = vpop.permute.xlu0 %1140
        %1142 = vrot.lane.b32.xlu0 %v1086, 127
        %v1143 = vpop.permute.xlu0 %1142
        %1144 = vrot.lane.b32.xlu0 %v1087, 127
        %v1145 = vpop.permute.xlu0 %1144
        %1146 = vrot.lane.b32.xlu0 %v1088, 127
        %v1147 = vpop.permute.xlu0 %1146
        %1148 = vrot.lane.b32.xlu0 %v1089, 127
        %v1149 = vpop.permute.xlu0 %1148
        %v1150 = vsel %vm702, %v1111, %v1113
        %v1151 = vsel %vm702, %v1113, %v1115
        %v1152 = vsel %vm702, %v1115, %v1117
        %v1153 = vsel %vm702, %v1117, %v1119
        %v1154 = vsel %vm702, %v1121, %v1123
        %v1155 = vsel %vm702, %v1123, %v1125
        %v1156 = vsel %vm702, %v1125, %v1127
        %v1157 = vsel %vm702, %v1127, %v1129
        %v1158 = vsel %vm702, %v1131, %v1133
        %v1159 = vsel %vm702, %v1133, %v1135
        %v1160 = vsel %vm702, %v1135, %v1137
        %v1161 = vsel %vm702, %v1137, %v1139
        %v1162 = vsel %vm702, %v1141, %v1143
        %v1163 = vsel %vm702, %v1143, %v1145
        %v1164 = vsel %vm702, %v1145, %v1147
        %v1165 = vsel %vm702, %v1147, %v1149
        %v1182 = vadd.f32 %v1033, %v1150
        %v1183 = vadd.f32 %v1034, %v1151
        %v1184 = vadd.f32 %v1035, %v1152
        %v1185 = vadd.f32 %v1036, %v1153
        %v1186 = vadd.f32 %v1037, %v1154
        %v1187 = vadd.f32 %v1038, %v1155
        %v1188 = vadd.f32 %v1039, %v1156
        %v1189 = vadd.f32 %v1040, %v1157
        %v1190 = vadd.f32 %v1041, %v1158
        %v1191 = vadd.f32 %v1042, %v1159
        %v1192 = vadd.f32 %v1043, %v1160
        %v1193 = vadd.f32 %v1044, %v1161
        %v1194 = vadd.f32 %v1045, %v1162
        %v1195 = vadd.f32 %v1046, %v1163
        %v1196 = vadd.f32 %v1047, %v1164
        %v1197 = vadd.f32 %v1048, %v1165
        %1198 = vset.pattern.permute.xlu0 4
        %1199 = vperm.xlu0 %1198, %v593
        %v1200 = vpop.permute.xlu0 %1199
        %1202 = vset.pattern.permute.xlu0 4
        %1203 = vperm.xlu0 %1202, %v594
        %v1204 = vpop.permute.xlu0 %1203
        %1206 = vset.pattern.permute.xlu0 4
        %1207 = vperm.xlu0 %1206, %v595
        %v1208 = vpop.permute.xlu0 %1207
        %1210 = vset.pattern.permute.xlu0 4
        %1211 = vperm.xlu0 %1210, %v596
        %v1212 = vpop.permute.xlu0 %1211
        %v1214 = vlaneseq
        %v1215 = vshrl.u32 %v1214, 7
        %v1216 = vsub.s32 4, %v1215
        %v1217 = vrot.slane %v238, %v1216
        %v1219 = vmul.f32 %v1200, %v543
        %v1220 = vmul.f32 %v1200, %v547
        %v1221 = vmul.f32 %v1200, %v551
        %v1222 = vmul.f32 %v1200, %v555
        %v1223 = vmul.f32 %v1200, %v1217
        %v1224 = vmul.f32 %v1204, %v543
        %v1225 = vmul.f32 %v1204, %v547
        %v1226 = vmul.f32 %v1204, %v551
        %v1227 = vmul.f32 %v1204, %v555
        %v1228 = vmul.f32 %v1204, %v1217
        %v1229 = vmul.f32 %v1208, %v543
        %v1230 = vmul.f32 %v1208, %v547
        %v1231 = vmul.f32 %v1208, %v551
        %v1232 = vmul.f32 %v1208, %v555
        %v1233 = vmul.f32 %v1208, %v1217
        %v1234 = vmul.f32 %v1212, %v543
        %v1235 = vmul.f32 %v1212, %v547
        %v1236 = vmul.f32 %v1212, %v551
        %v1237 = vmul.f32 %v1212, %v555
        %v1238 = vmul.f32 %v1212, %v1217
        %1259 = vrot.lane.b32.xlu0 %v1219, 127
        %v1260 = vpop.permute.xlu0 %1259
        %1261 = vrot.lane.b32.xlu0 %v1220, 127
        %v1262 = vpop.permute.xlu0 %1261
        %1263 = vrot.lane.b32.xlu0 %v1221, 127
        %v1264 = vpop.permute.xlu0 %1263
        %1265 = vrot.lane.b32.xlu0 %v1222, 127
        %v1266 = vpop.permute.xlu0 %1265
        %1267 = vrot.lane.b32.xlu0 %v1223, 127
        %v1268 = vpop.permute.xlu0 %1267
        %1269 = vrot.lane.b32.xlu0 %v1224, 127
        %v1270 = vpop.permute.xlu0 %1269
        %1271 = vrot.lane.b32.xlu0 %v1225, 127
        %v1272 = vpop.permute.xlu0 %1271
        %1273 = vrot.lane.b32.xlu0 %v1226, 127
        %v1274 = vpop.permute.xlu0 %1273
        %1275 = vrot.lane.b32.xlu0 %v1227, 127
        %v1276 = vpop.permute.xlu0 %1275
        %1277 = vrot.lane.b32.xlu0 %v1228, 127
        %v1278 = vpop.permute.xlu0 %1277
        %1279 = vrot.lane.b32.xlu0 %v1229, 127
        %v1280 = vpop.permute.xlu0 %1279
        %1281 = vrot.lane.b32.xlu0 %v1230, 127
        %v1282 = vpop.permute.xlu0 %1281
        %1283 = vrot.lane.b32.xlu0 %v1231, 127
        %v1284 = vpop.permute.xlu0 %1283
        %1285 = vrot.lane.b32.xlu0 %v1232, 127
        %v1286 = vpop.permute.xlu0 %1285
        %1287 = vrot.lane.b32.xlu0 %v1233, 127
        %v1288 = vpop.permute.xlu0 %1287
        %1289 = vrot.lane.b32.xlu0 %v1234, 127
        %v1290 = vpop.permute.xlu0 %1289
        %1291 = vrot.lane.b32.xlu0 %v1235, 127
        %v1292 = vpop.permute.xlu0 %1291
        %1293 = vrot.lane.b32.xlu0 %v1236, 127
        %v1294 = vpop.permute.xlu0 %1293
        %1295 = vrot.lane.b32.xlu0 %v1237, 127
        %v1296 = vpop.permute.xlu0 %1295
        %1297 = vrot.lane.b32.xlu0 %v1238, 127
        %v1298 = vpop.permute.xlu0 %1297
        %v1299 = vsel %vm702, %v1260, %v1262
        %v1300 = vsel %vm702, %v1262, %v1264
        %v1301 = vsel %vm702, %v1264, %v1266
        %v1302 = vsel %vm702, %v1266, %v1268
        %v1303 = vsel %vm702, %v1270, %v1272
        %v1304 = vsel %vm702, %v1272, %v1274
        %v1305 = vsel %vm702, %v1274, %v1276
        %v1306 = vsel %vm702, %v1276, %v1278
        %v1307 = vsel %vm702, %v1280, %v1282
        %v1308 = vsel %vm702, %v1282, %v1284
        %v1309 = vsel %vm702, %v1284, %v1286
        %v1310 = vsel %vm702, %v1286, %v1288
        %v1311 = vsel %vm702, %v1290, %v1292
        %v1312 = vsel %vm702, %v1292, %v1294
        %v1313 = vsel %vm702, %v1294, %v1296
        %v1314 = vsel %vm702, %v1296, %v1298
        %v1331 = vadd.f32 %v1182, %v1299
        %v1332 = vadd.f32 %v1183, %v1300
        %v1333 = vadd.f32 %v1184, %v1301
        %v1334 = vadd.f32 %v1185, %v1302
        %v1335 = vadd.f32 %v1186, %v1303
        %v1336 = vadd.f32 %v1187, %v1304
        %v1337 = vadd.f32 %v1188, %v1305
        %v1338 = vadd.f32 %v1189, %v1306
        %v1339 = vadd.f32 %v1190, %v1307
        %v1340 = vadd.f32 %v1191, %v1308
        %v1341 = vadd.f32 %v1192, %v1309
        %v1342 = vadd.f32 %v1193, %v1310
        %v1343 = vadd.f32 %v1194, %v1311
        %v1344 = vadd.f32 %v1195, %v1312
        %v1345 = vadd.f32 %v1196, %v1313
        %v1346 = vadd.f32 %v1197, %v1314
        %s1347 = smul.u32 %s26, 512
        %v1348 = vlaneseq
        %v1349 = vand.u32 %v1348, 127
        %v1350 = vadd.s32 %v1349, 128
        %v1351 = vadd.s32 %v1349, 256
        %v1352 = vadd.s32 %v1349, 384
        %v1353 = vstv %s1347
        %v1354 = vadd.s32 %v1353, %v1349
        %v1355 = vadd.s32 %v1353, %v1350
        %v1356 = vadd.s32 %v1353, %v1351
        %v1357 = vadd.s32 %v1353, %v1352
        %vm1358 = vcmp.lt.s32.totalorder %v1354, 799
        %vm1359 = vcmp.lt.s32.totalorder %v1355, 799
        %vm1360 = vcmp.lt.s32.totalorder %v1356, 799
        %vm1361 = vcmp.lt.s32.totalorder %v1357, 799
        %v1362 = vsel %vm1358, 1, 0
        %v1363 = vsel %vm1359, 1, 0
        %v1364 = vsel %vm1360, 1, 0
        %v1365 = vsel %vm1361, 1, 0
        %vm1366 = vcmp.eq.s32.totalorder %v1362, 1
        %vm1367 = vcmp.eq.s32.totalorder %v1363, 1
        %vm1368 = vcmp.eq.s32.totalorder %v1364, 1
        %vm1369 = vcmp.eq.s32.totalorder %v1365, 1
        %v1370 = vsel %vm1366, %v1331, 0.0
        %v1371 = vsel %vm1367, %v1332, 0.0
        %v1372 = vsel %vm1368, %v1333, 0.0
        %v1373 = vsel %vm1369, %v1334, 0.0
        %v1374 = vsel %vm1366, %v1335, 0.0
        %v1375 = vsel %vm1367, %v1336, 0.0
        %v1376 = vsel %vm1368, %v1337, 0.0
        %v1377 = vsel %vm1369, %v1338, 0.0
        %v1378 = vsel %vm1366, %v1339, 0.0
        %v1379 = vsel %vm1367, %v1340, 0.0
        %v1380 = vsel %vm1368, %v1341, 0.0
        %v1381 = vsel %vm1369, %v1342, 0.0
        %v1382 = vsel %vm1366, %v1343, 0.0
        %v1383 = vsel %vm1367, %v1344, 0.0
        %v1384 = vsel %vm1368, %v1345, 0.0
        %v1385 = vsel %vm1369, %v1346, 0.0
        %v1386 = vadd.f32 %v1370, %v1371
        %v1387 = vadd.f32 %v1386, %v1372
        %v1388 = vadd.f32 %v1387, %v1373
        %1389 = vadd.xlane.f32.xlu0 %v1388
        %v1390 = vpop.xlane.xlu0 %1389
        %v1391 = vadd.f32 %v1374, %v1375
        %v1392 = vadd.f32 %v1391, %v1376
        %v1393 = vadd.f32 %v1392, %v1377
        %1394 = vadd.xlane.f32.xlu0 %v1393
        %v1395 = vpop.xlane.xlu0 %1394
        %v1396 = vadd.f32 %v1378, %v1379
        %v1397 = vadd.f32 %v1396, %v1380
        %v1398 = vadd.f32 %v1397, %v1381
        %1399 = vadd.xlane.f32.xlu0 %v1398
        %v1400 = vpop.xlane.xlu0 %1399
        %v1401 = vadd.f32 %v1382, %v1383
        %v1402 = vadd.f32 %v1401, %v1384
        %v1403 = vadd.f32 %v1402, %v1385
        %1404 = vadd.xlane.f32.xlu0 %v1403
        %v1405 = vpop.xlane.xlu0 %1404
        %v1406 = vmul.f32 %v1370, %v1370
        %v1407 = vmul.f32 %v1371, %v1371
        %v1408 = vmul.f32 %v1372, %v1372
        %v1409 = vmul.f32 %v1373, %v1373
        %v1410 = vmul.f32 %v1374, %v1374
        %v1411 = vmul.f32 %v1375, %v1375
        %v1412 = vmul.f32 %v1376, %v1376
        %v1413 = vmul.f32 %v1377, %v1377
        %v1414 = vmul.f32 %v1378, %v1378
        %v1415 = vmul.f32 %v1379, %v1379
        %v1416 = vmul.f32 %v1380, %v1380
        %v1417 = vmul.f32 %v1381, %v1381
        %v1418 = vmul.f32 %v1382, %v1382
        %v1419 = vmul.f32 %v1383, %v1383
        %v1420 = vmul.f32 %v1384, %v1384
        %v1421 = vmul.f32 %v1385, %v1385
        %v1422 = vadd.f32 %v1406, %v1407
        %v1423 = vadd.f32 %v1422, %v1408
        %v1424 = vadd.f32 %v1423, %v1409
        %1425 = vadd.xlane.f32.xlu0 %v1424
        %v1426 = vpop.xlane.xlu0 %1425
        %v1427 = vadd.f32 %v1410, %v1411
        %v1428 = vadd.f32 %v1427, %v1412
        %v1429 = vadd.f32 %v1428, %v1413
        %1430 = vadd.xlane.f32.xlu0 %v1429
        %v1431 = vpop.xlane.xlu0 %1430
        %v1432 = vadd.f32 %v1414, %v1415
        %v1433 = vadd.f32 %v1432, %v1416
        %v1434 = vadd.f32 %v1433, %v1417
        %1435 = vadd.xlane.f32.xlu0 %v1434
        %v1436 = vpop.xlane.xlu0 %1435
        %v1437 = vadd.f32 %v1418, %v1419
        %v1438 = vadd.f32 %v1437, %v1420
        %v1439 = vadd.f32 %v1438, %v1421
        %1440 = vadd.xlane.f32.xlu0 %v1439
        %v1441 = vpop.xlane.xlu0 %1440
        %p1442 = scmp.eq.s32.totalorder %s26, 0
        // Predicated region
        $region45: #{tpu_custom_call.1} parent=31 // pred_check
          %p1443 = pneg %p1442
        $region46: #{tpu_custom_call.1} parent=31 // pred_check_branch
          %1445 = sbr.rel (%p1443) target = $region48
        $region47: #{tpu_custom_call.1} parent=31 // pred_region
          %vm1446 = vcmask 15360
          %1447 = vst.msk [vmem:[%s233] sm:$0xff] %vm1446, 0.0
          %1448 = vst.msk [vmem:[%s233 + $0x8] sm:$0xff] %vm1446, 0.0
          %1449 = vst.msk [vmem:[%s233 + $0x10] sm:$0xff] %vm1446, 0.0
          %1450 = vst.msk [vmem:[%s233 + $0x18] sm:$0xff] %vm1446, 0.0
        $region48: #{tpu_custom_call.1} parent=31 // pred_fallthru
          _
        %v1451 = vld [vmem:[%s233] sm:$0xff]
        %v1452 = vld [vmem:[%s233 + $0x8] sm:$0xff]
        %v1453 = vld [vmem:[%s233 + $0x10] sm:$0xff]
        %v1454 = vld [vmem:[%s233 + $0x18] sm:$0xff]
        %v1455 = vadd.f32 %v1451, %v1390
        %v1456 = vadd.f32 %v1452, %v1395
        %v1457 = vadd.f32 %v1453, %v1400
        %v1458 = vadd.f32 %v1454, %v1405
        %vm1459 = vcmask 7168
        %1460 = vst.msk [vmem:[%s233] sm:$0xff] %vm1459, %v1455
        %1461 = vst.msk [vmem:[%s233 + $0x8] sm:$0xff] %vm1459, %v1456
        %1462 = vst.msk [vmem:[%s233 + $0x10] sm:$0xff] %vm1459, %v1457
        %1463 = vst.msk [vmem:[%s233 + $0x18] sm:$0xff] %vm1459, %v1458
        %v1464 = vld [vmem:[%s233] sm:$0xff]
        %v1465 = vld [vmem:[%s233 + $0x8] sm:$0xff]
        %v1466 = vld [vmem:[%s233 + $0x10] sm:$0xff]
        %v1467 = vld [vmem:[%s233 + $0x18] sm:$0xff]
        %v1468 = vadd.f32 %v1464, %v1426
        %v1469 = vadd.f32 %v1465, %v1431
        %v1470 = vadd.f32 %v1466, %v1436
        %v1471 = vadd.f32 %v1467, %v1441
        %vm1472 = vcmask 15368
        %1473 = vst.msk [vmem:[%s233] sm:$0xff] %vm1472, %v1468
        %1474 = vst.msk [vmem:[%s233 + $0x8] sm:$0xff] %vm1472, %v1469
        %1475 = vst.msk [vmem:[%s233 + $0x10] sm:$0xff] %vm1472, %v1470
        %1476 = vst.msk [vmem:[%s233 + $0x18] sm:$0xff] %vm1472, %v1471
        %s1477 = sand.u32 %s111, 1
        %s1478 = scalar_lea.sflag [#allocation4], %s1477
        %s1479 = sand.u32 %s111, 1
        %s1480 = smul.addr %s1479, 32
        %s1481 = scalar_lea.vmem [#allocation8], %s1480
        // Predicated region
        $region49: #{tpu_custom_call.1} parent=31 // pred_check
          %p1482 = pneg %p121
        $region50: #{tpu_custom_call.1} parent=31 // pred_check_branch
          %1484 = sbr.rel (%p1482) target = $region52
        $region51: #{tpu_custom_call.1} parent=31 // pred_region
          %s1486 = ssub.s32 512, 512
          %1487 = vsyncadd %s1478, %s1486
          %s1488 = smul.addr %s25, 4
          %s1489 = smul.addr %s1488, 128
          %s1490 = scalar_lea.hbm %s3, %s1489
          %s1491 = sshll.u32 %s1481, 4
          %s1492 = int_to_ptr.vmem [resolvable:$true] %s1491
          %1497 = dma.vmem_to_hbm [thread:$0]  %s1492, 512, %s1490, %s1478, 128, 128, 8
        $region52: #{tpu_custom_call.1} parent=31 // pred_fallthru
          _
      $region32: #{tpu_custom_call.1} parent=5 // pred_fallthru
        _
      %p1498 = scmp.le.s32.totalorder 2, %s16
      // Predicated region
      $region53: #{tpu_custom_call.1} parent=5 // pred_check
        %p1499 = pneg %p1498
      $region54: #{tpu_custom_call.1} parent=5 // pred_check_branch
        %1501 = sbr.rel (%p1499) target = $region56
      $region55: #{tpu_custom_call.1} parent=5 // pred_region
        %s1502 = ssub.s32 %s16, 2
        // Predicated region
        $region57: #{tpu_custom_call.1} parent=55 // pred_check
          %p1503 = pneg %p127
        $region58: #{tpu_custom_call.1} parent=55 // pred_check_branch
          %1505 = sbr.rel (%p1503) target = $region60
        $region59: #{tpu_custom_call.1} parent=55 // pred_region
          %s1506 = sand.u32 %s112, 1
          %s1507 = scalar_lea.sflag [#allocation4], %s1506
          %s1508 = sand.u32 %s112, 1
          %s1509 = smul.addr %s1508, 32
          %s1510 = scalar_lea.vmem [#allocation8], %s1509
          %1511 = dma.done %s1507, 512
        $region60: #{tpu_custom_call.1} parent=55 // pred_fallthru
          _
      $region56: #{tpu_custom_call.1} parent=5 // pred_fallthru
        _
    $region6: #{tpu_custom_call.1} parent=1 // loop_footer
      %s20 = sadd.s32 1, %s16
    $region7: #{tpu_custom_call.1} parent=1 // loop_footer_branch
      %15 = sbr.rel target = $region3
    $region8: #{tpu_custom_call.1} parent=1 // loop_exit
      _
    %1512 = vsyncpa [#allocation3], 1
    %s1513 = scalar_lea.sflag [#allocation3], 1
    %1514 = vsyncpa %s1513, 1
    %1515 = vsyncpa [#allocation6], 1
    %1516 = vsyncpa [#allocation4], 1
    %s1517 = scalar_lea.sflag [#allocation4], 1
    %1518 = vsyncpa %s1517, 1

</llo_original>
